<compile_context>
chip_gen: v7x
topology: tpu7x:2x2x1
jax: 0.10.0
libtpu: 0.0.40
codegen_flags: <defaults>
</compile_context>

<pallas_src>
import jax
import jax.numpy as jnp
from jax.experimental import pallas as pl
from jax.experimental.pallas import tpu as pltpu

NPAD = 128  # lane-dense padded output-channel / hidden width


# ----------------------------- Pallas kernels ------------------------------


def _gemm_bias_tanh_kernel(x_ref, w_ref, b_ref, o_ref):
    """o = tanh(x @ w + b).  x:(tm,K) bf16, w:(K,NPAD) bf16, b:(1,NPAD) f32."""
    acc = jnp.dot(x_ref[...], w_ref[...], preferred_element_type=jnp.float32)
    o_ref[...] = jnp.tanh(acc + b_ref[...]).astype(o_ref.dtype)


def _head_kernel(x_ref, w5_ref, b5_ref, w1_ref, b1_ref, w2_ref, b2_ref, o_ref):
    """Fused conv5(as 400->120 FC) + tanh + fc1 + tanh + fc2 + softmax."""
    # conv5: spatial extent is exactly 5x5 so it is a plain FC over 400 cols.
    h = jnp.dot(x_ref[...], w5_ref[...], preferred_element_type=jnp.float32)
    h = jnp.tanh(h + b5_ref[...])
    # fc1 + tanh
    h = jnp.dot(h.astype(w1_ref.dtype), w1_ref[...],
                preferred_element_type=jnp.float32)
    h = jnp.tanh(h + b1_ref[...])
    # fc2 + softmax (padded classes carry a -1e30 bias -> exp() == 0)
    logits = jnp.dot(h.astype(w2_ref.dtype), w2_ref[...],
                     preferred_element_type=jnp.float32)
    logits = logits + b2_ref[...]
    logits = logits - jnp.max(logits, axis=-1, keepdims=True)
    e = jnp.exp(logits)
    s = jnp.sum(e, axis=-1, keepdims=True)
    r = pl.reciprocal(s, approx=True)      # EUP slot
    r = r * (2.0 - s * r)                  # one Newton step -> f32-exact rows
    o_ref[...] = (e * r).astype(o_ref.dtype)


# ----------------------------- Pallas wrappers ------------------------------


def pallas_gemm_bias_tanh(x, w, b, *, tile_m=512):
    """tanh(x @ w + b) tiled/pipelined over rows.

    x:(M,K) bf16, w:(K,NPAD) bf16, b:(1,NPAD) f32 -> (M,NPAD) bf16.
    """
    M, K = x.shape
    _, NP = w.shape
    # full dim (always legal) or an 8-divisible tile; edge block is masked.
    tm = M if M <= tile_m else tile_m
    return pl.pallas_call(
        _gemm_bias_tanh_kernel,
        out_shape=jax.ShapeDtypeStruct((M, NP), jnp.bfloat16),
        grid=(pl.cdiv(M, tm),),
        in_specs=[
            pl.BlockSpec((tm, K), lambda i: (i, 0)),
            pl.BlockSpec((K, NP), lambda i: (0, 0)),   # weights resident
            pl.BlockSpec((1, NP), lambda i: (0, 0)),   # bias resident
        ],
        out_specs=pl.BlockSpec((tm, NP), lambda i: (i, 0)),
        compiler_params=pltpu.CompilerParams(
            dimension_semantics=("parallel",),
            vmem_limit_bytes=32 * 1024 * 1024,  # ~2 MB actually used; safe on v7x
        ),
    )(x, w, b)


def pallas_head(x, p):
    """Fused conv5 + fc1 + fc2 + softmax.  x:(B,400) bf16 -> (B,NPAD) f32."""
    B = x.shape[0]
    return pl.pallas_call(
        _head_kernel,
        out_shape=jax.ShapeDtypeStruct((B, NPAD), jnp.float32),
    )(x, p["conv5_w"], p["conv5_b"], p["fc1_w"], p["fc1_b"],
      p["fc2_w"], p["fc2_b"])


# ------------------------------ JAX-side glue -------------------------------


def _im2col_nhwc(x, k):
    """x:(B,H,W,C) -> (B*OH*OW, k*k*C), column order (kh, kw, C)."""
    B, H, W, C = x.shape
    OH, OW = H - k + 1, W - k + 1
    patches = [x[:, di:di + OH, dj:dj + OW, :]
               for di in range(k) for dj in range(k)]
    cols = jnp.concatenate(patches, axis=-1)        # (B, OH, OW, k*k*C)
    return cols.reshape(B * OH * OW, k * k * C), (B, OH, OW)


def maxpool2x2_nhwc(x):
    """2x2 stride-2 max pool on NHWC (matches nn.MaxPool2d(2, 2))."""
    return jnp.maximum(
        jnp.maximum(x[:, 0::2, 0::2, :], x[:, 0::2, 1::2, :]),
        jnp.maximum(x[:, 1::2, 0::2, :], x[:, 1::2, 1::2, :]),
    )


# --------------------------- parameters (PyTorch-like) ----------------------


def init_params(key):
    """PyTorch-layout params, uniform(-1/sqrt(fan_in), 1/sqrt(fan_in))."""
    def uni(k, shape, fan_in):
        bound = 1.0 / jnp.sqrt(jnp.float32(fan_in))
        return jax.random.uniform(k, shape, jnp.float32, -bound, bound)

    keys = jax.random.split(key, 10)
    return {
        "conv1_w": uni(keys[0], (6, 3, 5, 5), 3 * 5 * 5),
        "conv1_b": uni(keys[1], (6,), 3 * 5 * 5),
        "conv3_w": uni(keys[2], (16, 6, 5, 5), 6 * 5 * 5),
        "conv3_b": uni(keys[3], (16,), 6 * 5 * 5),
        "conv5_w": uni(keys[4], (120, 16, 5, 5), 16 * 5 * 5),
        "conv5_b": uni(keys[5], (120,), 16 * 5 * 5),
        "fc1_w": uni(keys[6], (84, 120), 120),
        "fc1_b": uni(keys[7], (84,), 120),
        "fc2_w": uni(keys[8], (10, 84), 84),
        "fc2_b": uni(keys[9], (10,), 84),
    }


def prepare_params(p):
    """One-time conversion to kernel layout: transpose, pad to 128, bf16."""
    def pad_cols(a):
        return jnp.pad(a, ((0, 0), (0, NPAD - a.shape[1])))

    def conv_w(w):  # (Cout,Cin,k,k) -> (k*k*Cin, NPAD) bf16, (kh,kw,Cin) rows
        cout = w.shape[0]
        wm = jnp.transpose(w, (2, 3, 1, 0)).reshape(-1, cout)
        return pad_cols(wm).astype(jnp.bfloat16)

    def bias_row(b, fill=0.0):  # (N,) -> (1, NPAD) f32
        return jnp.pad(b.reshape(1, -1), ((0, 0), (0, NPAD - b.shape[0])),
                       constant_values=fill).astype(jnp.float32)

    def fc_w(w):  # PyTorch (out,in) -> (NPAD, NPAD) bf16 (zero-padded)
        wm = w.T
        wm = jnp.pad(wm, ((0, NPAD - wm.shape[0]), (0, NPAD - wm.shape[1])))
        return wm.astype(jnp.bfloat16)

    return {
        "conv1_w": conv_w(p["conv1_w"]), "conv1_b": bias_row(p["conv1_b"]),
        "conv3_w": conv_w(p["conv3_w"]), "conv3_b": bias_row(p["conv3_b"]),
        "conv5_w": conv_w(p["conv5_w"]), "conv5_b": bias_row(p["conv5_b"]),
        "fc1_w": fc_w(p["fc1_w"]), "fc1_b": bias_row(p["fc1_b"]),
        "fc2_w": fc_w(p["fc2_w"]),
        # padded (fake) classes get a -1e30 bias so their softmax weight is 0
        "fc2_b": bias_row(p["fc2_b"], fill=-1e30),
    }


# ------------------------------- forward ------------------------------------


def lenet_forward(params, x):
    # x: (B, 3, 32, 32) NCHW f32 (PyTorch layout) -> NHWC bf16
    x = jnp.transpose(x, (0, 2, 3, 1)).astype(jnp.bfloat16)

    # conv1 + tanh + maxpool
    cols, (B, OH, OW) = _im2col_nhwc(x, 5)                          # (B*784, 75)
    y = pallas_gemm_bias_tanh(cols, params["conv1_w"], params["conv1_b"])
    y = y[:, :6].reshape(B, OH, OW, 6)                              # (B,28,28,6)
    y = maxpool2x2_nhwc(y)                                          # (B,14,14,6)

    # conv3 + tanh + maxpool
    cols, (B, OH, OW) = _im2col_nhwc(y, 5)                          # (B*100, 150)
    y = pallas_gemm_bias_tanh(cols, params["conv3_w"], params["conv3_b"])
    y = y[:, :16].reshape(B, OH, OW, 16)                            # (B,10,10,16)
    y = maxpool2x2_nhwc(y)                                          # (B,5,5,16)

    # fused conv5 + fc1 + fc2 + softmax (NHWC flatten matches conv5 weight rows)
    flat = y.reshape(B, 5 * 5 * 16)                                 # (B,400)
    out = pallas_head(flat, params)                                 # (B,128) f32
    return out[:, :10]


if __name__ == "__main__":
    key = jax.random.PRNGKey(0)
    pkey, xkey = jax.random.split(key)
    params = prepare_params(init_params(pkey))

    # LeNet for CIFAR-10 needs 32x32x3 input (conv5 reduces 5x5 -> 1x1).
    x = jax.random.normal(xkey, (2, 3, 32, 32), dtype=jnp.float32)

    out = jax.jit(lenet_forward)(params, x)
    out = jax.block_until_ready(out)

    assert out.shape == (2, 10)
    # softmax rows must sum to 1
    assert jnp.allclose(jnp.sum(out, axis=1), 1.0, atol=1e-3)
    assert bool(jnp.all(out >= 0.0))
    print("KERNEL_OK")
</pallas_src>

<mosaic_0001>
module attributes {stable_mosaic.version = 11 : i64} {
  func.func @_gemm_bias_tanh_kernel(%arg0: i32, %arg1: memref<512x75xbf16, #tpu.memory_space<vmem>>, %arg2: memref<75x128xbf16, #tpu.memory_space<vmem>>, %arg3: memref<1x128xf32, #tpu.memory_space<vmem>>, %arg4: memref<512x128xbf16, #tpu.memory_space<vmem>>) attributes {dimension_semantics = [#tpu.dimension_semantics<parallel>], iteration_bounds = array<i64: 4>, scalar_prefetch = 0 : i64, scratch_operands = 0 : i64, tpu.core_type = #tpu.core_type<tc>, window_params = [{transform_indices = @transform_0, window_bounds = array<i64: 512, 75>}, {pipeline_mode = #tpu.pipeline_mode<synchronous>, transform_indices = @transform_1, window_bounds = array<i64: 75, 128>}, {pipeline_mode = #tpu.pipeline_mode<synchronous>, transform_indices = @transform_2, window_bounds = array<i64: 1, 128>}, {transform_indices = @transform_3, window_bounds = array<i64: 512, 128>}]} {
    %c0 = arith.constant 0 : index
    %c0_0 = arith.constant 0 : index
    %0 = vector.load %arg1[%c0, %c0_0] : memref<512x75xbf16, #tpu.memory_space<vmem>>, vector<512x75xbf16>
    %c0_1 = arith.constant 0 : index
    %c0_2 = arith.constant 0 : index
    %1 = vector.load %arg2[%c0_1, %c0_2] : memref<75x128xbf16, #tpu.memory_space<vmem>>, vector<75x128xbf16>
    %cst = arith.constant dense<0.000000e+00> : vector<512x128xf32>
    %2 = tpu.matmul %0, %1, %cst {dimension_numbers = #tpu.dot_dimension_numbers<[1], [0], [0], [1], [0, 0, 1, 1], [], []>} : vector<512x75xbf16>, vector<75x128xbf16>, vector<512x128xf32> -> vector<512x128xf32>
    %c0_3 = arith.constant 0 : index
    %c0_4 = arith.constant 0 : index
    %3 = vector.load %arg3[%c0_3, %c0_4] : memref<1x128xf32, #tpu.memory_space<vmem>>, vector<1x128xf32>
    %4 = vector.broadcast %3 : vector<1x128xf32> to vector<512x128xf32>
    %5 = arith.addf %2, %4 : vector<512x128xf32>
    %6 = math.tanh %5 : vector<512x128xf32>
    %7 = arith.truncf %6 : vector<512x128xf32> to vector<512x128xbf16>
    %c0_5 = arith.constant 0 : index
    %c0_6 = arith.constant 0 : index
    %8 = vector.load %arg4[%c0_5, %c0_6] : memref<512x128xbf16, #tpu.memory_space<vmem>>, vector<512x128xbf16>
    tpu.vector_store %arg4[%c0_5, %c0_6], %7 {strides = array<i32>} : memref<512x128xbf16, #tpu.memory_space<vmem>>, vector<512x128xbf16>,
    return
  }
  func.func @transform_0(%arg0: i32) -> (i32, i32) {
    %c0_i32 = arith.constant 0 : i32
    %c0_i32_0 = arith.constant 0 : i32
    return %arg0, %c0_i32 : i32, i32
  }
  func.func @transform_1(%arg0: i32) -> (i32, i32) {
    %c0_i32 = arith.constant 0 : i32
    %c0_i32_0 = arith.constant 0 : i32
    %c0_i32_1 = arith.constant 0 : i32
    return %c0_i32, %c0_i32_0 : i32, i32
  }
  func.func @transform_2(%arg0: i32) -> (i32, i32) {
    %c0_i32 = arith.constant 0 : i32
    %c0_i32_0 = arith.constant 0 : i32
    %c0_i32_1 = arith.constant 0 : i32
    return %c0_i32, %c0_i32_0 : i32, i32
  }
  func.func @transform_3(%arg0: i32) -> (i32, i32) {
    %c0_i32 = arith.constant 0 : i32
    %c0_i32_0 = arith.constant 0 : i32
    return %arg0, %c0_i32 : i32, i32
  }
}

module attributes {stable_mosaic.version = 11 : i64} {
  func.func @_gemm_bias_tanh_kernel(%arg0: i32, %arg1: memref<200x150xbf16, #tpu.memory_space<vmem>>, %arg2: memref<150x128xbf16, #tpu.memory_space<vmem>>, %arg3: memref<1x128xf32, #tpu.memory_space<vmem>>, %arg4: memref<200x128xbf16, #tpu.memory_space<vmem>>) attributes {dimension_semantics = [#tpu.dimension_semantics<parallel>], iteration_bounds = array<i64: 1>, scalar_prefetch = 0 : i64, scratch_operands = 0 : i64, tpu.core_type = #tpu.core_type<tc>, window_params = [{transform_indices = @transform_0, window_bounds = array<i64: 200, 150>}, {pipeline_mode = #tpu.pipeline_mode<synchronous>, transform_indices = @transform_1, window_bounds = array<i64: 150, 128>}, {pipeline_mode = #tpu.pipeline_mode<synchronous>, transform_indices = @transform_2, window_bounds = array<i64: 1, 128>}, {transform_indices = @transform_3, window_bounds = array<i64: 200, 128>}]} {
    %c0 = arith.constant 0 : index
    %c0_0 = arith.constant 0 : index
    %0 = vector.load %arg1[%c0, %c0_0] : memref<200x150xbf16, #tpu.memory_space<vmem>>, vector<200x150xbf16>
    %c0_1 = arith.constant 0 : index
    %c0_2 = arith.constant 0 : index
    %1 = vector.load %arg2[%c0_1, %c0_2] : memref<150x128xbf16, #tpu.memory_space<vmem>>, vector<150x128xbf16>
    %cst = arith.constant dense<0.000000e+00> : vector<200x128xf32>
    %2 = tpu.matmul %0, %1, %cst {dimension_numbers = #tpu.dot_dimension_numbers<[1], [0], [0], [1], [0, 0, 1, 1], [], []>} : vector<200x150xbf16>, vector<150x128xbf16>, vector<200x128xf32> -> vector<200x128xf32>
    %c0_3 = arith.constant 0 : index
    %c0_4 = arith.constant 0 : index
    %3 = vector.load %arg3[%c0_3, %c0_4] : memref<1x128xf32, #tpu.memory_space<vmem>>, vector<1x128xf32>
    %4 = vector.broadcast %3 : vector<1x128xf32> to vector<200x128xf32>
    %5 = arith.addf %2, %4 : vector<200x128xf32>
    %6 = math.tanh %5 : vector<200x128xf32>
    %7 = arith.truncf %6 : vector<200x128xf32> to vector<200x128xbf16>
    %c0_5 = arith.constant 0 : index
    %c0_6 = arith.constant 0 : index
    %8 = vector.load %arg4[%c0_5, %c0_6] : memref<200x128xbf16, #tpu.memory_space<vmem>>, vector<200x128xbf16>
    tpu.vector_store %arg4[%c0_5, %c0_6], %7 {strides = array<i32>} : memref<200x128xbf16, #tpu.memory_space<vmem>>, vector<200x128xbf16>,
    return
  }
  func.func @transform_0(%arg0: i32) -> (i32, i32) {
    %c0_i32 = arith.constant 0 : i32
    %c0_i32_0 = arith.constant 0 : i32
    return %arg0, %c0_i32 : i32, i32
  }
  func.func @transform_1(%arg0: i32) -> (i32, i32) {
    %c0_i32 = arith.constant 0 : i32
    %c0_i32_0 = arith.constant 0 : i32
    %c0_i32_1 = arith.constant 0 : i32
    return %c0_i32, %c0_i32_0 : i32, i32
  }
  func.func @transform_2(%arg0: i32) -> (i32, i32) {
    %c0_i32 = arith.constant 0 : i32
    %c0_i32_0 = arith.constant 0 : i32
    %c0_i32_1 = arith.constant 0 : i32
    return %c0_i32, %c0_i32_0 : i32, i32
  }
  func.func @transform_3(%arg0: i32) -> (i32, i32) {
    %c0_i32 = arith.constant 0 : i32
    %c0_i32_0 = arith.constant 0 : i32
    return %arg0, %c0_i32 : i32, i32
  }
}

module attributes {stable_mosaic.version = 11 : i64} {
  func.func @_head_kernel(%arg0: memref<2x400xbf16, #tpu.memory_space<vmem>>, %arg1: memref<400x128xbf16, #tpu.memory_space<vmem>>, %arg2: memref<1x128xf32, #tpu.memory_space<vmem>>, %arg3: memref<128x128xbf16, #tpu.memory_space<vmem>>, %arg4: memref<1x128xf32, #tpu.memory_space<vmem>>, %arg5: memref<128x128xbf16, #tpu.memory_space<vmem>>, %arg6: memref<1x128xf32, #tpu.memory_space<vmem>>, %arg7: memref<2x128xf32, #tpu.memory_space<vmem>>) attributes {dimension_semantics = [], scalar_prefetch = 0 : i64, scratch_operands = 0 : i64, tpu.core_type = #tpu.core_type<tc>} {
    %c0 = arith.constant 0 : index
    %c0_0 = arith.constant 0 : index
    %0 = vector.load %arg0[%c0, %c0_0] : memref<2x400xbf16, #tpu.memory_space<vmem>>, vector<2x400xbf16>
    %c0_1 = arith.constant 0 : index
    %c0_2 = arith.constant 0 : index
    %1 = vector.load %arg1[%c0_1, %c0_2] : memref<400x128xbf16, #tpu.memory_space<vmem>>, vector<400x128xbf16>
    %cst = arith.constant dense<0.000000e+00> : vector<2x128xf32>
    %2 = tpu.matmul %0, %1, %cst {dimension_numbers = #tpu.dot_dimension_numbers<[1], [0], [0], [1], [0, 0, 1, 1], [], []>} : vector<2x400xbf16>, vector<400x128xbf16>, vector<2x128xf32> -> vector<2x128xf32>
    %c0_3 = arith.constant 0 : index
    %c0_4 = arith.constant 0 : index
    %3 = vector.load %arg2[%c0_3, %c0_4] : memref<1x128xf32, #tpu.memory_space<vmem>>, vector<1x128xf32>
    %4 = vector.broadcast %3 : vector<1x128xf32> to vector<2x128xf32>
    %5 = arith.addf %2, %4 : vector<2x128xf32>
    %6 = math.tanh %5 : vector<2x128xf32>
    %7 = arith.truncf %6 : vector<2x128xf32> to vector<2x128xbf16>
    %c0_5 = arith.constant 0 : index
    %c0_6 = arith.constant 0 : index
    %8 = vector.load %arg3[%c0_5, %c0_6] : memref<128x128xbf16, #tpu.memory_space<vmem>>, vector<128x128xbf16>
    %cst_7 = arith.constant dense<0.000000e+00> : vector<2x128xf32>
    %9 = tpu.matmul %7, %8, %cst_7 {dimension_numbers = #tpu.dot_dimension_numbers<[1], [0], [0], [1], [0, 0, 1, 1], [], []>} : vector<2x128xbf16>, vector<128x128xbf16>, vector<2x128xf32> -> vector<2x128xf32>
    %c0_8 = arith.constant 0 : index
    %c0_9 = arith.constant 0 : index
    %10 = vector.load %arg4[%c0_8, %c0_9] : memref<1x128xf32, #tpu.memory_space<vmem>>, vector<1x128xf32>
    %11 = vector.broadcast %10 : vector<1x128xf32> to vector<2x128xf32>
    %12 = arith.addf %9, %11 : vector<2x128xf32>
    %13 = math.tanh %12 : vector<2x128xf32>
    %14 = arith.truncf %13 : vector<2x128xf32> to vector<2x128xbf16>
    %c0_10 = arith.constant 0 : index
    %c0_11 = arith.constant 0 : index
    %15 = vector.load %arg5[%c0_10, %c0_11] : memref<128x128xbf16, #tpu.memory_space<vmem>>, vector<128x128xbf16>
    %cst_12 = arith.constant dense<0.000000e+00> : vector<2x128xf32>
    %16 = tpu.matmul %14, %15, %cst_12 {dimension_numbers = #tpu.dot_dimension_numbers<[1], [0], [0], [1], [0, 0, 1, 1], [], []>} : vector<2x128xbf16>, vector<128x128xbf16>, vector<2x128xf32> -> vector<2x128xf32>
    %c0_13 = arith.constant 0 : index
    %c0_14 = arith.constant 0 : index
    %17 = vector.load %arg6[%c0_13, %c0_14] : memref<1x128xf32, #tpu.memory_space<vmem>>, vector<1x128xf32>
    %18 = vector.broadcast %17 : vector<1x128xf32> to vector<2x128xf32>
    %19 = arith.addf %16, %18 : vector<2x128xf32>
    %cst_15 = arith.constant dense<0xFF800000> : vector<2xf32>
    %20 = vector.multi_reduction <maximumf>, %19, %cst_15 [1] : vector<2x128xf32> to vector<2xf32>
    %21 = vector.shape_cast %20 : vector<2xf32> to vector<2x1xf32>
    %22 = vector.broadcast %21 : vector<2x1xf32> to vector<2x128xf32>
    %23 = arith.subf %19, %22 : vector<2x128xf32>
    %24 = math.exp %23 : vector<2x128xf32>
    %cst_16 = arith.constant dense<0.000000e+00> : vector<2xf32>
    %25 = vector.multi_reduction <add>, %24, %cst_16 [1] : vector<2x128xf32> to vector<2xf32>
    %26 = vector.shape_cast %25 : vector<2xf32> to vector<2x1xf32>
    %27 = tpu.reciprocal %26 {approx = true} : vector<2x1xf32> -> vector<2x1xf32>
    %28 = arith.mulf %26, %27 : vector<2x1xf32>
    %cst_17 = arith.constant 2.000000e+00 : f32
    %29 = vector.broadcast %cst_17 : f32 to vector<2x1xf32>
    %30 = arith.subf %29, %28 : vector<2x1xf32>
    %31 = arith.mulf %27, %30 : vector<2x1xf32>
    %32 = vector.broadcast %31 : vector<2x1xf32> to vector<2x128xf32>
    %33 = arith.mulf %24, %32 : vector<2x128xf32>
    %c0_18 = arith.constant 0 : index
    %c0_19 = arith.constant 0 : index
    %34 = vector.load %arg7[%c0_18, %c0_19] : memref<2x128xf32, #tpu.memory_space<vmem>>, vector<2x128xf32>
    tpu.vector_store %arg7[%c0_18, %c0_19], %33 {strides = array<i32>} : memref<2x128xf32, #tpu.memory_space<vmem>>, vector<2x128xf32>,
    return
  }
}

</mosaic_0001>

<llo_original>
// kernel: lenet_forward.3
$region0: #{lenet_forward.3}
  #allocation0 [shape = 'u32[]', space=smem, size = 0x4, offset = 0x4, fixed_abs, tag = 'smem constant byte address 0x4 - core index']
  #allocation1 [shape = 'u32[144,128]{1,0:T(1,128)}', space=vmem, size = 0x12000, scoped, tag = 'internal scratch']
  %s0 = inlined_call_operand.vmem [shape: bf16[1568,75], index: 0, kind: input, shape index: {}]
  %s1 = inlined_call_operand.vmem [shape: bf16[75,128], index: 1, kind: input, shape index: {}]
  %s2 = inlined_call_operand.vmem [shape: f32[1,128], index: 2, kind: input, shape index: {}]
  %s3 = inlined_call_operand.vmem [shape: bf16[1568,128], index: 3, kind: output, shape index: {}]
  %s4 = sld [smem:[#allocation0]]
  $region89: #{lenet_forward.3} parent=0
    _
  %s6 = ssub.s32 1, %s4
  %s7 = scalar_select 0, %s6, %s4
  $region1: #{lenet_forward.3} parent=0
    #allocation2 [shape = 'u8[262144]{0}', space=vmem, size = 0x40000, scoped, tag = 'output window, operand 0']
    loop: start=0, step=1, limit=6
    $region2: #{lenet_forward.3} parent=1 // loop_pre_header
      _
    $region3: #{lenet_forward.3} parent=1 // loop_header
      %s9 = sphi 0, %s13
      %p10 = scmp.ge.s32.totalorder %s9, 6
      %s19 = sphi 0, %s21
      %s22 = sphi 0, %s19
      %s23 = sphi 0, %s22
      %s39 = sphi 0, %s23
      %s43 = sphi 0, %s43
      %s45 = sphi 0, %s43
      %s46 = sphi 0, %s45
      %s60 = sphi 0, %s46
      %s64 = sphi 0, %s64
      %s66 = sphi 0, %s64
      %s67 = sphi 0, %s66
      %s81 = sphi 0, %s67
      %s87 = sphi 0, %s89
      %s90 = sphi 0, %s87
      %s91 = sphi 0, %s90
      %s107 = sphi 0, %s91
    $region4: #{lenet_forward.3} parent=1 // loop_header_branch
      %12 = sbr.rel (%p10) target = $region8
    $region5: #{lenet_forward.3} parent=1 // loop_body
      %s14 = ssub.s32 %s9, 1
      %s15 = ssub.s32 %s9, 2
      %s16 = sadd.s32 %s9, 1
      %s17 = ssub.s32 %s9, %s16
      %p18 = scmp.eq.s32.totalorder %s17, 0
      %s20 = sadd.s32 %s19, 1
      %s21 = scalar_select %p18, %s19, %s20
      %p24 = pneg %p18
      %p25 = scmp.eq.s32.totalorder %s9, 3
      %p26 = por %p24, %p25
      %p27 = scmp.ne.s32.totalorder %s19, %s22
      %p28 = scmp.eq.s32.totalorder %s9, 0
      %p29 = por %p27, %p28
      %p30 = scmp.ne.s32.totalorder %s19, %s22
      %p31 = scmp.eq.s32.totalorder %s14, 3
      %p32 = por %p30, %p31
      %p33 = scmp.ne.s32.totalorder %s22, %s23
      %p34 = scmp.eq.s32.totalorder %s14, 0
      %p35 = por %p33, %p34
      %p36 = scmp.ne.s32.totalorder %s22, %s23
      %p37 = scmp.eq.s32.totalorder %s15, 3
      %p38 = por %p36, %p37
      %p40 = scmp.ne.s32.totalorder %s23, %s39
      %p41 = scmp.eq.s32.totalorder %s15, 0
      %p42 = por %p40, %p41
      %s44 = sadd.s32 %s43, 1
      %p47 = scmp.eq.s32.totalorder %s9, 3
      %p48 = scmp.ne.s32.totalorder %s43, %s45
      %p49 = scmp.eq.s32.totalorder %s9, 0
      %p50 = por %p48, %p49
      %p51 = scmp.ne.s32.totalorder %s43, %s45
      %p52 = scmp.eq.s32.totalorder %s14, 3
      %p53 = por %p51, %p52
      %p54 = scmp.ne.s32.totalorder %s45, %s46
      %p55 = scmp.eq.s32.totalorder %s14, 0
      %p56 = por %p54, %p55
      %p57 = scmp.ne.s32.totalorder %s45, %s46
      %p58 = scmp.eq.s32.totalorder %s15, 3
      %p59 = por %p57, %p58
      %p61 = scmp.ne.s32.totalorder %s46, %s60
      %p62 = scmp.eq.s32.totalorder %s15, 0
      %p63 = por %p61, %p62
      %s65 = sadd.s32 %s64, 1
      %p68 = scmp.eq.s32.totalorder %s9, 3
      %p69 = scmp.ne.s32.totalorder %s64, %s66
      %p70 = scmp.eq.s32.totalorder %s9, 0
      %p71 = por %p69, %p70
      %p72 = scmp.ne.s32.totalorder %s64, %s66
      %p73 = scmp.eq.s32.totalorder %s14, 3
      %p74 = por %p72, %p73
      %p75 = scmp.ne.s32.totalorder %s66, %s67
      %p76 = scmp.eq.s32.totalorder %s14, 0
      %p77 = por %p75, %p76
      %p78 = scmp.ne.s32.totalorder %s66, %s67
      %p79 = scmp.eq.s32.totalorder %s15, 3
      %p80 = por %p78, %p79
      %p82 = scmp.ne.s32.totalorder %s67, %s81
      %p83 = scmp.eq.s32.totalorder %s15, 0
      %p84 = por %p82, %p83
      %s85 = ssub.s32 %s9, %s16
      %p86 = scmp.eq.s32.totalorder %s85, 0
      %s88 = sadd.s32 %s87, 1
      %s89 = scalar_select %p86, %s87, %s88
      %p92 = pneg %p86
      %p93 = scmp.eq.s32.totalorder %s9, 3
      %p94 = por %p92, %p93
      %p95 = scmp.ne.s32.totalorder %s87, %s90
      %p96 = scmp.eq.s32.totalorder %s9, 0
      %p97 = por %p95, %p96
      %p98 = scmp.ne.s32.totalorder %s87, %s90
      %p99 = scmp.eq.s32.totalorder %s14, 3
      %p100 = por %p98, %p99
      %p101 = scmp.ne.s32.totalorder %s90, %s91
      %p102 = scmp.eq.s32.totalorder %s14, 0
      %p103 = por %p101, %p102
      %p104 = scmp.ne.s32.totalorder %s90, %s91
      %p105 = scmp.eq.s32.totalorder %s15, 3
      %p106 = por %p104, %p105
      %p108 = scmp.ne.s32.totalorder %s91, %s107
      %p109 = scmp.eq.s32.totalorder %s15, 0
      %p110 = por %p108, %p109
      %p111 = scmp.le.s32.totalorder 1, %s9
      %p112 = scmp.lt.s32.totalorder %s9, 5
      %p113 = pnand %p111, %p112
      %p114 = pneg %p113
      // Predicated region
      $region9: #{lenet_forward.3} parent=5 // pred_check
        _
      $region10: #{lenet_forward.3} parent=5 // pred_check_branch
        %116 = sbr.rel (%p113) target = $region12
      $region11: #{lenet_forward.3} parent=5 // pred_region
        %s117 = ssub.s32 %s9, 1
        // Predicated region
        $region13: #{lenet_forward.3} parent=11 // pred_check
          %p118 = pneg %p56
        $region14: #{lenet_forward.3} parent=11 // pred_check_branch
          %120 = sbr.rel (%p118) target = $region16
        $region15: #{lenet_forward.3} parent=11 // pred_region
          _
        $region16: #{lenet_forward.3} parent=11 // pred_fallthru
          _
        // Predicated region
        $region17: #{lenet_forward.3} parent=11 // pred_check
          %p121 = pneg %p77
        $region18: #{lenet_forward.3} parent=11 // pred_check_branch
          %123 = sbr.rel (%p121) target = $region20
        $region19: #{lenet_forward.3} parent=11 // pred_region
          _
        $region20: #{lenet_forward.3} parent=11 // pred_fallthru
          _
      $region12: #{lenet_forward.3} parent=5 // pred_fallthru
        _
      %p124 = scmp.lt.s32.totalorder %s9, 4
      // Predicated region
      $region21: #{lenet_forward.3} parent=5 // pred_check
        %p125 = pneg %p124
      $region22: #{lenet_forward.3} parent=5 // pred_check_branch
        %127 = sbr.rel (%p125) target = $region24
      $region23: #{lenet_forward.3} parent=5 // pred_region
        // Predicated region
        $region25: #{lenet_forward.3} parent=23 // pred_check
          %p128 = pneg %p29
        $region26: #{lenet_forward.3} parent=23 // pred_check_branch
          %130 = sbr.rel (%p128) target = $region28
        $region27: #{lenet_forward.3} parent=23 // pred_region
          %s131 = smul.u32 64, %s9
          %s132 = ssub.s32 196, %s131
          %p133 = scmp.lt.s32.totalorder %s132, 64
          %s134 = scalar_select %p133, %s132, 64
          %s135 = smul.u32 64, %s134
          %p136 = scmp.lt.s32.totalorder %s131, 195
          %s137 = scalar_select %p136, %s131, 195
          %s138 = smul.addr %s137, 4
          %s139 = scalar_lea.vmem %s0, %s138
          %s140 = smul.u32 64, %s9
          %s141 = ssub.s32 196, %s140
          %p142 = scmp.lt.s32.totalorder %s141, 64
          %s143 = scalar_select %p142, %s141, 64
          %s144 = smul.u32 64, %s143
        $region28: #{lenet_forward.3} parent=23 // pred_fallthru
          _
      $region24: #{lenet_forward.3} parent=5 // pred_fallthru
        _
      %p145 = scmp.le.s32.totalorder 1, %s9
      %p146 = scmp.lt.s32.totalorder %s9, 5
      %p147 = pnand %p145, %p146
      %p148 = pneg %p147
      // Predicated region
      $region29: #{lenet_forward.3} parent=5 // pred_check
        _
      $region30: #{lenet_forward.3} parent=5 // pred_check_branch
        %150 = sbr.rel (%p147) target = $region32
      $region31: #{lenet_forward.3} parent=5 // pred_region
        %s151 = ssub.s32 %s9, 1
        %s152 = smul.u32 64, %s14
        %s153 = ssub.s32 196, %s152
        %p154 = scmp.lt.s32.totalorder %s153, 64
        %s155 = scalar_select %p154, %s153, 64
        %s156 = smul.u32 64, %s155
        %p157 = scmp.lt.s32.totalorder %s152, 195
        %s158 = scalar_select %p157, %s152, 195
        %s159 = smul.addr %s158, 4
        %s160 = scalar_lea.vmem %s0, %s159
        %p161 = pneg %p35
        %p162 = pneg %p32
        %p163 = pneg %p56
        %p164 = pneg %p53
        %p165 = pneg %p77
        %p166 = pneg %p74
        %p167 = pneg %p103
        %p168 = pneg %p100
        %s169 = sand.u32 %s90, 1
        %s170 = sand.u32 %s90, 1
        %s171 = smul.addr %s170, 256
        %s172 = scalar_lea.vmem [#allocation2], %s171
        %s173 = smul.u32 64, %s14
        %s174 = ssub.s32 196, %s173
        %p175 = scmp.lt.s32.totalorder %s174, 64
        %s176 = scalar_select %p175, %s174, 64
        %s177 = smul.u32 64, %s176
        %p178 = scmp.lt.s32.totalorder %s173, 195
        %s179 = scalar_select %p178, %s173, 195
        %s180 = smul.addr %s179, 4
        %s181 = scalar_lea.vmem %s0, %s180
        %s182 = smul.u32 64, %s14
        %s183 = ssub.s32 196, %s182
        %p184 = scmp.lt.s32.totalorder %s183, 64
        %s185 = scalar_select %p184, %s183, 64
        %s186 = smul.u32 64, %s185
        %s187 = smul.u32 64, %s14
        %s188 = ssub.s32 196, %s187
        %p189 = scmp.lt.s32.totalorder %s188, 64
        %s190 = scalar_select %p189, %s188, 64
        %s191 = smul.u32 64, %s190
        %v193 = vld [vmem:[%s181] sm:$0xf]
        %v194 = vld [vmem:[%s181 + $0x4] sm:$0xf]
        %v195 = vld [vmem:[%s181 + $0x8] sm:$0xf]
        %v196 = vld [vmem:[%s181 + $0xc] sm:$0xf]
        %v197 = vld [vmem:[%s181 + $0x10] sm:$0xf]
        %v198 = vld [vmem:[%s181 + $0x14] sm:$0xf]
        %v199 = vld [vmem:[%s181 + $0x18] sm:$0xf]
        %v200 = vld [vmem:[%s181 + $0x1c] sm:$0xf]
        %v201 = vld [vmem:[%s181 + $0x20] sm:$0xf]
        %v202 = vld [vmem:[%s181 + $0x24] sm:$0xf]
        %v203 = vld [vmem:[%s181 + $0x28] sm:$0xf]
        %v204 = vld [vmem:[%s181 + $0x2c] sm:$0xf]
        %v205 = vld [vmem:[%s181 + $0x30] sm:$0xf]
        %v206 = vld [vmem:[%s181 + $0x34] sm:$0xf]
        %v207 = vld [vmem:[%s181 + $0x38] sm:$0xf]
        %v208 = vld [vmem:[%s181 + $0x3c] sm:$0xf]
        %v209 = vld [vmem:[%s181 + $0x40] sm:$0xf]
        %v210 = vld [vmem:[%s181 + $0x44] sm:$0xf]
        %v211 = vld [vmem:[%s181 + $0x48] sm:$0xf]
        %v212 = vld [vmem:[%s181 + $0x4c] sm:$0xf]
        %v213 = vld [vmem:[%s181 + $0x50] sm:$0xf]
        %v214 = vld [vmem:[%s181 + $0x54] sm:$0xf]
        %v215 = vld [vmem:[%s181 + $0x58] sm:$0xf]
        %v216 = vld [vmem:[%s181 + $0x5c] sm:$0xf]
        %v217 = vld [vmem:[%s181 + $0x60] sm:$0xf]
        %v218 = vld [vmem:[%s181 + $0x64] sm:$0xf]
        %v219 = vld [vmem:[%s181 + $0x68] sm:$0xf]
        %v220 = vld [vmem:[%s181 + $0x6c] sm:$0xf]
        %v221 = vld [vmem:[%s181 + $0x70] sm:$0xf]
        %v222 = vld [vmem:[%s181 + $0x74] sm:$0xf]
        %v223 = vld [vmem:[%s181 + $0x78] sm:$0xf]
        %v224 = vld [vmem:[%s181 + $0x7c] sm:$0xf]
        %v225 = vld [vmem:[%s181 + $0x80] sm:$0xf]
        %v226 = vld [vmem:[%s181 + $0x84] sm:$0xf]
        %v227 = vld [vmem:[%s181 + $0x88] sm:$0xf]
        %v228 = vld [vmem:[%s181 + $0x8c] sm:$0xf]
        %v229 = vld [vmem:[%s181 + $0x90] sm:$0xf]
        %v230 = vld [vmem:[%s181 + $0x94] sm:$0xf]
        %v231 = vld [vmem:[%s181 + $0x98] sm:$0xf]
        %v232 = vld [vmem:[%s181 + $0x9c] sm:$0xf]
        %v233 = vld [vmem:[%s181 + $0xa0] sm:$0xf]
        %v234 = vld [vmem:[%s181 + $0xa4] sm:$0xf]
        %v235 = vld [vmem:[%s181 + $0xa8] sm:$0xf]
        %v236 = vld [vmem:[%s181 + $0xac] sm:$0xf]
        %v237 = vld [vmem:[%s181 + $0xb0] sm:$0xf]
        %v238 = vld [vmem:[%s181 + $0xb4] sm:$0xf]
        %v239 = vld [vmem:[%s181 + $0xb8] sm:$0xf]
        %v240 = vld [vmem:[%s181 + $0xbc] sm:$0xf]
        %v241 = vld [vmem:[%s181 + $0xc0] sm:$0xf]
        %v242 = vld [vmem:[%s181 + $0xc4] sm:$0xf]
        %v243 = vld [vmem:[%s181 + $0xc8] sm:$0xf]
        %v244 = vld [vmem:[%s181 + $0xcc] sm:$0xf]
        %v245 = vld [vmem:[%s181 + $0xd0] sm:$0xf]
        %v246 = vld [vmem:[%s181 + $0xd4] sm:$0xf]
        %v247 = vld [vmem:[%s181 + $0xd8] sm:$0xf]
        %v248 = vld [vmem:[%s181 + $0xdc] sm:$0xf]
        %v249 = vld [vmem:[%s181 + $0xe0] sm:$0xf]
        %v250 = vld [vmem:[%s181 + $0xe4] sm:$0xf]
        %v251 = vld [vmem:[%s181 + $0xe8] sm:$0xf]
        %v252 = vld [vmem:[%s181 + $0xec] sm:$0xf]
        %v253 = vld [vmem:[%s181 + $0xf0] sm:$0xf]
        %v254 = vld [vmem:[%s181 + $0xf4] sm:$0xf]
        %v255 = vld [vmem:[%s181 + $0xf8] sm:$0xf]
        %v256 = vld [vmem:[%s181 + $0xfc] sm:$0xf]
        %v257 = vld [vmem:[%s1] sm:$0xf]
        %v258 = vld [vmem:[%s1 + $0x4] sm:$0xf]
        %v259 = vld [vmem:[%s1 + $0x8] sm:$0xf]
        %v260 = vld [vmem:[%s1 + $0xc] sm:$0xf]
        %v261 = vld [vmem:[%s1 + $0x10] sm:$0xf]
        %v262 = vld [vmem:[%s1 + $0x14] sm:$0xf]
        %v263 = vld [vmem:[%s1 + $0x18] sm:$0xf]
        %v264 = vld [vmem:[%s1 + $0x1c] sm:$0xf]
        %v265 = vld [vmem:[%s1 + $0x20] sm:$0xf]
        %v266 = vld [vmem:[%s1 + $0x24] sm:$0x3]
        %v267 = vld [vmem:[%s2] sm:$0x1]
        %v269 = vlaneseq
        %v270 = vshrl.u32 %v269, 7
        %v271 = vsub.s32 0, %v270
        %v272 = vrot.slane %v267, %v271
        %v338 = vunpack.c.l.b16 %v193
        %v339 = vunpack.c.l.b16 %v194
        %v340 = vunpack.c.l.b16 %v195
        %v341 = vunpack.c.l.b16 %v196
        %v342 = vunpack.c.l.b16 %v197
        %v343 = vunpack.c.l.b16 %v198
        %v344 = vunpack.c.l.b16 %v199
        %v345 = vunpack.c.l.b16 %v200
        %v346 = vunpack.c.l.b16 %v201
        %v347 = vunpack.c.l.b16 %v202
        %v348 = vunpack.c.l.b16 %v203
        %v349 = vunpack.c.l.b16 %v204
        %v350 = vunpack.c.l.b16 %v205
        %v351 = vunpack.c.l.b16 %v206
        %v352 = vunpack.c.l.b16 %v207
        %v353 = vunpack.c.l.b16 %v208
        %v354 = vunpack.c.l.b16 %v209
        %v355 = vunpack.c.l.b16 %v210
        %v356 = vunpack.c.l.b16 %v211
        %v357 = vunpack.c.l.b16 %v212
        %v358 = vunpack.c.l.b16 %v213
        %v359 = vunpack.c.l.b16 %v214
        %v360 = vunpack.c.l.b16 %v215
        %v361 = vunpack.c.l.b16 %v216
        %v362 = vunpack.c.l.b16 %v217
        %v363 = vunpack.c.l.b16 %v218
        %v364 = vunpack.c.l.b16 %v219
        %v365 = vunpack.c.l.b16 %v220
        %v366 = vunpack.c.l.b16 %v221
        %v367 = vunpack.c.l.b16 %v222
        %v368 = vunpack.c.l.b16 %v223
        %v369 = vunpack.c.l.b16 %v224
        %v370 = vunpack.c.l.b16 %v225
        %v371 = vunpack.c.l.b16 %v226
        %v372 = vunpack.c.l.b16 %v227
        %v373 = vunpack.c.l.b16 %v228
        %v374 = vunpack.c.l.b16 %v229
        %v375 = vunpack.c.l.b16 %v230
        %v376 = vunpack.c.l.b16 %v231
        %v377 = vunpack.c.l.b16 %v232
        %v378 = vunpack.c.l.b16 %v233
        %v379 = vunpack.c.l.b16 %v234
        %v380 = vunpack.c.l.b16 %v235
        %v381 = vunpack.c.l.b16 %v236
        %v382 = vunpack.c.l.b16 %v237
        %v383 = vunpack.c.l.b16 %v238
        %v384 = vunpack.c.l.b16 %v239
        %v385 = vunpack.c.l.b16 %v240
        %v386 = vunpack.c.l.b16 %v241
        %v387 = vunpack.c.l.b16 %v242
        %v388 = vunpack.c.l.b16 %v243
        %v389 = vunpack.c.l.b16 %v244
        %v390 = vunpack.c.l.b16 %v245
        %v391 = vunpack.c.l.b16 %v246
        %v392 = vunpack.c.l.b16 %v247
        %v393 = vunpack.c.l.b16 %v248
        %v394 = vunpack.c.l.b16 %v249
        %v395 = vunpack.c.l.b16 %v250
        %v396 = vunpack.c.l.b16 %v251
        %v397 = vunpack.c.l.b16 %v252
        %v398 = vunpack.c.l.b16 %v253
        %v399 = vunpack.c.l.b16 %v254
        %v400 = vunpack.c.l.b16 %v255
        %v401 = vunpack.c.l.b16 %v256
        %v402 = vpack.c.b16 %v339, %v338
        %v403 = vpack.c.b16 %v341, %v340
        %v404 = vpack.c.b16 %v343, %v342
        %v405 = vpack.c.b16 %v345, %v344
        %v406 = vpack.c.b16 %v347, %v346
        %v407 = vpack.c.b16 %v349, %v348
        %v408 = vpack.c.b16 %v351, %v350
        %v409 = vpack.c.b16 %v353, %v352
        %v410 = vpack.c.b16 %v355, %v354
        %v411 = vpack.c.b16 %v357, %v356
        %v412 = vpack.c.b16 %v359, %v358
        %v413 = vpack.c.b16 %v361, %v360
        %v414 = vpack.c.b16 %v363, %v362
        %v415 = vpack.c.b16 %v365, %v364
        %v416 = vpack.c.b16 %v367, %v366
        %v417 = vpack.c.b16 %v369, %v368
        %v418 = vpack.c.b16 %v371, %v370
        %v419 = vpack.c.b16 %v373, %v372
        %v420 = vpack.c.b16 %v375, %v374
        %v421 = vpack.c.b16 %v377, %v376
        %v422 = vpack.c.b16 %v379, %v378
        %v423 = vpack.c.b16 %v381, %v380
        %v424 = vpack.c.b16 %v383, %v382
        %v425 = vpack.c.b16 %v385, %v384
        %v426 = vpack.c.b16 %v387, %v386
        %v427 = vpack.c.b16 %v389, %v388
        %v428 = vpack.c.b16 %v391, %v390
        %v429 = vpack.c.b16 %v393, %v392
        %v430 = vpack.c.b16 %v395, %v394
        %v431 = vpack.c.b16 %v397, %v396
        %v432 = vpack.c.b16 %v399, %v398
        %v433 = vpack.c.b16 %v401, %v400
        %v444 = vunpack.c.l.b16 %v257
        %v445 = vunpack.c.l.b16 %v258
        %v446 = vunpack.c.l.b16 %v259
        %v447 = vunpack.c.l.b16 %v260
        %v448 = vunpack.c.l.b16 %v261
        %v449 = vunpack.c.l.b16 %v262
        %v450 = vunpack.c.l.b16 %v263
        %v451 = vunpack.c.l.b16 %v264
        %v452 = vunpack.c.l.b16 %v265
        %v453 = vunpack.c.l.b16 %v266
        %v454 = vpack.c.b16 %v445, %v444
        %v455 = vpack.c.b16 %v447, %v446
        %v456 = vpack.c.b16 %v449, %v448
        %v457 = vpack.c.b16 %v451, %v450
        %v458 = vpack.c.b16 %v453, %v452
        %vm463 = vcmask 613376
        %v465 = vsel %vm463, %v402, 0
        %v468 = vsel %vm463, %v403, 0
        %v471 = vsel %vm463, %v404, 0
        %v474 = vsel %vm463, %v405, 0
        %v477 = vsel %vm463, %v406, 0
        %v480 = vsel %vm463, %v407, 0
        %v483 = vsel %vm463, %v408, 0
        %v486 = vsel %vm463, %v409, 0
        %v489 = vsel %vm463, %v410, 0
        %v492 = vsel %vm463, %v411, 0
        %v495 = vsel %vm463, %v412, 0
        %v498 = vsel %vm463, %v413, 0
        %v501 = vsel %vm463, %v414, 0
        %v504 = vsel %vm463, %v415, 0
        %v507 = vsel %vm463, %v416, 0
        %v510 = vsel %vm463, %v417, 0
        %v513 = vsel %vm463, %v418, 0
        %v516 = vsel %vm463, %v419, 0
        %v519 = vsel %vm463, %v420, 0
        %v522 = vsel %vm463, %v421, 0
        %v525 = vsel %vm463, %v422, 0
        %v528 = vsel %vm463, %v423, 0
        %v531 = vsel %vm463, %v424, 0
        %v534 = vsel %vm463, %v425, 0
        %v537 = vsel %vm463, %v426, 0
        %v540 = vsel %vm463, %v427, 0
        %v543 = vsel %vm463, %v428, 0
        %v546 = vsel %vm463, %v429, 0
        %v549 = vsel %vm463, %v430, 0
        %v552 = vsel %vm463, %v431, 0
        %v555 = vsel %vm463, %v432, 0
        %v558 = vsel %vm463, %v433, 0
        %vm560 = vcmask 1044480
        %vm561 = vcmask 1045504
        %v562 = vsel %vm560, 4294967295, 65535
        %v563 = vsel %vm561, %v562, 0
        %v565 = vand.u32 %v458, %v563
        %567 = vmatprep.subr.bf16.mxu0 0
        %568 = vmatpush1.bf16.msra.mxu0 %v454
        %569 = vmatprep.subr.bf16.mxu0 0
        %570 = vmatpush1.bf16.msra.mxu0 %v455
        %571 = vmatprep.subr.bf16.mxu0 0
        %572 = vmatpush1.bf16.msra.mxu0 %v456
        %573 = vmatprep.subr.bf16.mxu0 0
        %574 = vmatpush1.bf16.msra.mxu0 %v457
        %575 = vmatprep.subr.bf16.mxu0 0
        %576 = vmatpush1.bf16.msra.mxu0 %v565
        %577 = vmatprep.subr.bf16.mxu0 0
        %578 = vmatpush1.bf16.msra.mxu0 0
        %579 = vmatprep.subr.bf16.mxu0 0
        %580 = vmatpush1.bf16.msra.mxu0 0
        %581 = vmatprep.subr.bf16.mxu0 0
        %582 = vmatpush1.bf16.msra.mxu0 0
        %583 = vmatprep.subr.bf16.mxu0 0
        %584 = vmatpush1.bf16.msra.mxu0 0
        %585 = vmatprep.subr.bf16.mxu0 0
        %586 = vmatpush1.bf16.msra.mxu0 0
        %587 = vmatprep.subr.bf16.mxu0 0
        %588 = vmatpush1.bf16.msra.mxu0 0
        %589 = vmatprep.subr.bf16.mxu0 0
        %590 = vmatpush1.bf16.msra.mxu0 0
        %591 = vmatprep.subr.bf16.mxu0 0
        %592 = vmatpush1.bf16.msra.mxu0 0
        %593 = vmatprep.subr.bf16.mxu0 0
        %594 = vmatpush1.bf16.msra.mxu0 0
        %595 = vmatprep.subr.bf16.mxu0 0
        %596 = vmatpush1.bf16.msra.mxu0 0
        %597 = vmatprep.subr.bf16.mxu0 0
        %598 = vmatpush1.bf16.msra.mxu0 0
        %599 = vmatprep.mubr.bf16.mxu0 0
        %600 = vmatmul.mubr.bf16.gmra.mrb[0].mxu0 %v465
        %v601 = vpop.f32.mrb[0].mxu0
        %v602 = vadd.f32 %v272, %v601
        %v603 = vpop.f32.mrb[0].mxu0
        %v604 = vpop.f32.mrb[0].mxu0
        %v605 = vadd.f32 %v272, %v604
        %v606 = vpop.f32.mrb[0].mxu0
        %607 = vmatprep.mubr.bf16.mxu0 0
        %608 = vmatmul.mubr.bf16.gmra.mrb[0].mxu0 %v468
        %v609 = vpop.f32.mrb[0].mxu0
        %v610 = vadd.f32 %v272, %v609
        %v611 = vpop.f32.mrb[0].mxu0
        %v612 = vpop.f32.mrb[0].mxu0
        %v613 = vadd.f32 %v272, %v612
        %v614 = vpop.f32.mrb[0].mxu0
        %615 = vmatprep.mubr.bf16.mxu0 0
        %616 = vmatmul.mubr.bf16.gmra.mrb[0].mxu0 %v471
        %v617 = vpop.f32.mrb[0].mxu0
        %v618 = vadd.f32 %v272, %v617
        %v619 = vpop.f32.mrb[0].mxu0
        %v620 = vpop.f32.mrb[0].mxu0
        %v621 = vadd.f32 %v272, %v620
        %v622 = vpop.f32.mrb[0].mxu0
        %623 = vmatprep.mubr.bf16.mxu0 0
        %624 = vmatmul.mubr.bf16.gmra.mrb[0].mxu0 %v474
        %v625 = vpop.f32.mrb[0].mxu0
        %v626 = vadd.f32 %v272, %v625
        %v627 = vpop.f32.mrb[0].mxu0
        %v628 = vpop.f32.mrb[0].mxu0
        %v629 = vadd.f32 %v272, %v628
        %v630 = vpop.f32.mrb[0].mxu0
        %631 = vmatprep.mubr.bf16.mxu0 0
        %632 = vmatmul.mubr.bf16.gmra.mrb[0].mxu0 %v477
        %v633 = vpop.f32.mrb[0].mxu0
        %v634 = vadd.f32 %v272, %v633
        %v635 = vpop.f32.mrb[0].mxu0
        %v636 = vpop.f32.mrb[0].mxu0
        %v637 = vadd.f32 %v272, %v636
        %v638 = vpop.f32.mrb[0].mxu0
        %639 = vmatprep.mubr.bf16.mxu0 0
        %640 = vmatmul.mubr.bf16.gmra.mrb[0].mxu0 %v480
        %v641 = vpop.f32.mrb[0].mxu0
        %v642 = vadd.f32 %v272, %v641
        %v643 = vpop.f32.mrb[0].mxu0
        %v644 = vpop.f32.mrb[0].mxu0
        %v645 = vadd.f32 %v272, %v644
        %v646 = vpop.f32.mrb[0].mxu0
        %647 = vmatprep.mubr.bf16.mxu0 0
        %648 = vmatmul.mubr.bf16.gmra.mrb[0].mxu0 %v483
        %v649 = vpop.f32.mrb[0].mxu0
        %v650 = vadd.f32 %v272, %v649
        %v651 = vpop.f32.mrb[0].mxu0
        %v652 = vpop.f32.mrb[0].mxu0
        %v653 = vadd.f32 %v272, %v652
        %v654 = vpop.f32.mrb[0].mxu0
        %655 = vmatprep.mubr.bf16.mxu0 0
        %656 = vmatmul.mubr.bf16.gmra.mrb[0].mxu0 %v486
        %v657 = vpop.f32.mrb[0].mxu0
        %v658 = vadd.f32 %v272, %v657
        %v659 = vpop.f32.mrb[0].mxu0
        %v660 = vpop.f32.mrb[0].mxu0
        %v661 = vadd.f32 %v272, %v660
        %v662 = vpop.f32.mrb[0].mxu0
        %663 = vmatprep.mubr.bf16.mxu0 0
        %664 = vmatmul.mubr.bf16.gmra.mrb[0].mxu0 %v489
        %v665 = vpop.f32.mrb[0].mxu0
        %v666 = vadd.f32 %v272, %v665
        %v667 = vpop.f32.mrb[0].mxu0
        %v668 = vpop.f32.mrb[0].mxu0
        %v669 = vadd.f32 %v272, %v668
        %v670 = vpop.f32.mrb[0].mxu0
        %671 = vmatprep.mubr.bf16.mxu0 0
        %672 = vmatmul.mubr.bf16.gmra.mrb[0].mxu0 %v492
        %v673 = vpop.f32.mrb[0].mxu0
        %v674 = vadd.f32 %v272, %v673
        %v675 = vpop.f32.mrb[0].mxu0
        %v676 = vpop.f32.mrb[0].mxu0
        %v677 = vadd.f32 %v272, %v676
        %v678 = vpop.f32.mrb[0].mxu0
        %679 = vmatprep.mubr.bf16.mxu0 0
        %680 = vmatmul.mubr.bf16.gmra.mrb[0].mxu0 %v495
        %v681 = vpop.f32.mrb[0].mxu0
        %v682 = vadd.f32 %v272, %v681
        %v683 = vpop.f32.mrb[0].mxu0
        %v684 = vpop.f32.mrb[0].mxu0
        %v685 = vadd.f32 %v272, %v684
        %v686 = vpop.f32.mrb[0].mxu0
        %687 = vmatprep.mubr.bf16.mxu0 0
        %688 = vmatmul.mubr.bf16.gmra.mrb[0].mxu0 %v498
        %v689 = vpop.f32.mrb[0].mxu0
        %v690 = vadd.f32 %v272, %v689
        %v691 = vpop.f32.mrb[0].mxu0
        %v692 = vpop.f32.mrb[0].mxu0
        %v693 = vadd.f32 %v272, %v692
        %v694 = vpop.f32.mrb[0].mxu0
        %695 = vmatprep.mubr.bf16.mxu0 0
        %696 = vmatmul.mubr.bf16.gmra.mrb[0].mxu0 %v501
        %v697 = vpop.f32.mrb[0].mxu0
        %v698 = vadd.f32 %v272, %v697
        %v699 = vpop.f32.mrb[0].mxu0
        %v700 = vpop.f32.mrb[0].mxu0
        %v701 = vadd.f32 %v272, %v700
        %v702 = vpop.f32.mrb[0].mxu0
        %703 = vmatprep.mubr.bf16.mxu0 0
        %704 = vmatmul.mubr.bf16.gmra.mrb[0].mxu0 %v504
        %v705 = vpop.f32.mrb[0].mxu0
        %v706 = vadd.f32 %v272, %v705
        %v707 = vpop.f32.mrb[0].mxu0
        %v708 = vpop.f32.mrb[0].mxu0
        %v709 = vadd.f32 %v272, %v708
        %v710 = vpop.f32.mrb[0].mxu0
        %711 = vmatprep.mubr.bf16.mxu0 0
        %712 = vmatmul.mubr.bf16.gmra.mrb[0].mxu0 %v507
        %v713 = vpop.f32.mrb[0].mxu0
        %v714 = vadd.f32 %v272, %v713
        %v715 = vpop.f32.mrb[0].mxu0
        %v716 = vpop.f32.mrb[0].mxu0
        %v717 = vadd.f32 %v272, %v716
        %v718 = vpop.f32.mrb[0].mxu0
        %719 = vmatprep.mubr.bf16.mxu0 0
        %720 = vmatmul.mubr.bf16.gmra.mrb[0].mxu0 %v510
        %v721 = vpop.f32.mrb[0].mxu0
        %v722 = vadd.f32 %v272, %v721
        %v723 = vpop.f32.mrb[0].mxu0
        %v724 = vpop.f32.mrb[0].mxu0
        %v725 = vadd.f32 %v272, %v724
        %v726 = vpop.f32.mrb[0].mxu0
        %727 = vmatprep.mubr.bf16.mxu0 0
        %728 = vmatmul.mubr.bf16.gmra.mrb[0].mxu0 %v513
        %v729 = vpop.f32.mrb[0].mxu0
        %v730 = vadd.f32 %v272, %v729
        %v731 = vpop.f32.mrb[0].mxu0
        %v732 = vpop.f32.mrb[0].mxu0
        %v733 = vadd.f32 %v272, %v732
        %v734 = vpop.f32.mrb[0].mxu0
        %735 = vmatprep.mubr.bf16.mxu0 0
        %736 = vmatmul.mubr.bf16.gmra.mrb[0].mxu0 %v516
        %v737 = vpop.f32.mrb[0].mxu0
        %v738 = vadd.f32 %v272, %v737
        %v739 = vpop.f32.mrb[0].mxu0
        %v740 = vpop.f32.mrb[0].mxu0
        %v741 = vadd.f32 %v272, %v740
        %v742 = vpop.f32.mrb[0].mxu0
        %743 = vmatprep.mubr.bf16.mxu0 0
        %744 = vmatmul.mubr.bf16.gmra.mrb[0].mxu0 %v519
        %v745 = vpop.f32.mrb[0].mxu0
        %v746 = vadd.f32 %v272, %v745
        %v747 = vpop.f32.mrb[0].mxu0
        %v748 = vpop.f32.mrb[0].mxu0
        %v749 = vadd.f32 %v272, %v748
        %v750 = vpop.f32.mrb[0].mxu0
        %751 = vmatprep.mubr.bf16.mxu0 0
        %752 = vmatmul.mubr.bf16.gmra.mrb[0].mxu0 %v522
        %v753 = vpop.f32.mrb[0].mxu0
        %v754 = vadd.f32 %v272, %v753
        %v755 = vpop.f32.mrb[0].mxu0
        %v756 = vpop.f32.mrb[0].mxu0
        %v757 = vadd.f32 %v272, %v756
        %v758 = vpop.f32.mrb[0].mxu0
        %759 = vmatprep.mubr.bf16.mxu0 0
        %760 = vmatmul.mubr.bf16.gmra.mrb[0].mxu0 %v525
        %v761 = vpop.f32.mrb[0].mxu0
        %v762 = vadd.f32 %v272, %v761
        %v763 = vpop.f32.mrb[0].mxu0
        %v764 = vpop.f32.mrb[0].mxu0
        %v765 = vadd.f32 %v272, %v764
        %v766 = vpop.f32.mrb[0].mxu0
        %767 = vmatprep.mubr.bf16.mxu0 0
        %768 = vmatmul.mubr.bf16.gmra.mrb[0].mxu0 %v528
        %v769 = vpop.f32.mrb[0].mxu0
        %v770 = vadd.f32 %v272, %v769
        %v771 = vpop.f32.mrb[0].mxu0
        %v772 = vpop.f32.mrb[0].mxu0
        %v773 = vadd.f32 %v272, %v772
        %v774 = vpop.f32.mrb[0].mxu0
        %775 = vmatprep.mubr.bf16.mxu0 0
        %776 = vmatmul.mubr.bf16.gmra.mrb[0].mxu0 %v531
        %v777 = vpop.f32.mrb[0].mxu0
        %v778 = vadd.f32 %v272, %v777
        %v779 = vpop.f32.mrb[0].mxu0
        %v780 = vpop.f32.mrb[0].mxu0
        %v781 = vadd.f32 %v272, %v780
        %v782 = vpop.f32.mrb[0].mxu0
        %783 = vmatprep.mubr.bf16.mxu0 0
        %784 = vmatmul.mubr.bf16.gmra.mrb[0].mxu0 %v534
        %v785 = vpop.f32.mrb[0].mxu0
        %v786 = vadd.f32 %v272, %v785
        %v787 = vpop.f32.mrb[0].mxu0
        %v788 = vpop.f32.mrb[0].mxu0
        %v789 = vadd.f32 %v272, %v788
        %v790 = vpop.f32.mrb[0].mxu0
        %791 = vmatprep.mubr.bf16.mxu0 0
        %792 = vmatmul.mubr.bf16.gmra.mrb[0].mxu0 %v537
        %v793 = vpop.f32.mrb[0].mxu0
        %v794 = vadd.f32 %v272, %v793
        %v795 = vpop.f32.mrb[0].mxu0
        %v796 = vpop.f32.mrb[0].mxu0
        %v797 = vadd.f32 %v272, %v796
        %v798 = vpop.f32.mrb[0].mxu0
        %799 = vmatprep.mubr.bf16.mxu0 0
        %800 = vmatmul.mubr.bf16.gmra.mrb[0].mxu0 %v540
        %v801 = vpop.f32.mrb[0].mxu0
        %v802 = vadd.f32 %v272, %v801
        %v803 = vpop.f32.mrb[0].mxu0
        %v804 = vpop.f32.mrb[0].mxu0
        %v805 = vadd.f32 %v272, %v804
        %v806 = vpop.f32.mrb[0].mxu0
        %807 = vmatprep.mubr.bf16.mxu0 0
        %808 = vmatmul.mubr.bf16.gmra.mrb[0].mxu0 %v543
        %v809 = vpop.f32.mrb[0].mxu0
        %v810 = vadd.f32 %v272, %v809
        %v811 = vpop.f32.mrb[0].mxu0
        %v812 = vpop.f32.mrb[0].mxu0
        %v813 = vadd.f32 %v272, %v812
        %v814 = vpop.f32.mrb[0].mxu0
        %815 = vmatprep.mubr.bf16.mxu0 0
        %816 = vmatmul.mubr.bf16.gmra.mrb[0].mxu0 %v546
        %v817 = vpop.f32.mrb[0].mxu0
        %v818 = vadd.f32 %v272, %v817
        %v819 = vpop.f32.mrb[0].mxu0
        %v820 = vpop.f32.mrb[0].mxu0
        %v821 = vadd.f32 %v272, %v820
        %v822 = vpop.f32.mrb[0].mxu0
        %823 = vmatprep.mubr.bf16.mxu0 0
        %824 = vmatmul.mubr.bf16.gmra.mrb[0].mxu0 %v549
        %v825 = vpop.f32.mrb[0].mxu0
        %v826 = vadd.f32 %v272, %v825
        %v827 = vpop.f32.mrb[0].mxu0
        %v828 = vpop.f32.mrb[0].mxu0
        %v829 = vadd.f32 %v272, %v828
        %v830 = vpop.f32.mrb[0].mxu0
        %831 = vmatprep.mubr.bf16.mxu0 0
        %832 = vmatmul.mubr.bf16.gmra.mrb[0].mxu0 %v552
        %v833 = vpop.f32.mrb[0].mxu0
        %v834 = vadd.f32 %v272, %v833
        %v835 = vpop.f32.mrb[0].mxu0
        %v836 = vpop.f32.mrb[0].mxu0
        %v837 = vadd.f32 %v272, %v836
        %v838 = vpop.f32.mrb[0].mxu0
        %839 = vmatprep.mubr.bf16.mxu0 0
        %840 = vmatmul.mubr.bf16.gmra.mrb[0].mxu0 %v555
        %v841 = vpop.f32.mrb[0].mxu0
        %v842 = vadd.f32 %v272, %v841
        %v843 = vpop.f32.mrb[0].mxu0
        %v844 = vpop.f32.mrb[0].mxu0
        %v845 = vadd.f32 %v272, %v844
        %v846 = vpop.f32.mrb[0].mxu0
        %847 = vmatprep.mubr.bf16.mxu0 0
        %848 = vmatmul.mubr.bf16.gmra.mrb[0].mxu0 %v558
        %v849 = vpop.f32.mrb[0].mxu0
        %v850 = vadd.f32 %v272, %v849
        %v851 = vpop.f32.mrb[0].mxu0
        %v852 = vpop.f32.mrb[0].mxu0
        %v853 = vadd.f32 %v272, %v852
        %v854 = vpop.f32.mrb[0].mxu0
        %855 = vdwg.mxu0
        %v856 = vtanh.pop %v602
        %v857 = vtanh.pop %v605
        %v858 = vtanh.pop %v610
        %v859 = vtanh.pop %v613
        %v860 = vtanh.pop %v618
        %v861 = vtanh.pop %v621
        %v862 = vtanh.pop %v626
        %v863 = vtanh.pop %v629
        %v864 = vtanh.pop %v634
        %v865 = vtanh.pop %v637
        %v866 = vtanh.pop %v642
        %v867 = vtanh.pop %v645
        %v868 = vtanh.pop %v650
        %v869 = vtanh.pop %v653
        %v870 = vtanh.pop %v658
        %v871 = vtanh.pop %v661
        %v872 = vtanh.pop %v666
        %v873 = vtanh.pop %v669
        %v874 = vtanh.pop %v674
        %v875 = vtanh.pop %v677
        %v876 = vtanh.pop %v682
        %v877 = vtanh.pop %v685
        %v878 = vtanh.pop %v690
        %v879 = vtanh.pop %v693
        %v880 = vtanh.pop %v698
        %v881 = vtanh.pop %v701
        %v882 = vtanh.pop %v706
        %v883 = vtanh.pop %v709
        %v884 = vtanh.pop %v714
        %v885 = vtanh.pop %v717
        %v886 = vtanh.pop %v722
        %v887 = vtanh.pop %v725
        %v888 = vtanh.pop %v730
        %v889 = vtanh.pop %v733
        %v890 = vtanh.pop %v738
        %v891 = vtanh.pop %v741
        %v892 = vtanh.pop %v746
        %v893 = vtanh.pop %v749
        %v894 = vtanh.pop %v754
        %v895 = vtanh.pop %v757
        %v896 = vtanh.pop %v762
        %v897 = vtanh.pop %v765
        %v898 = vtanh.pop %v770
        %v899 = vtanh.pop %v773
        %v900 = vtanh.pop %v778
        %v901 = vtanh.pop %v781
        %v902 = vtanh.pop %v786
        %v903 = vtanh.pop %v789
        %v904 = vtanh.pop %v794
        %v905 = vtanh.pop %v797
        %v906 = vtanh.pop %v802
        %v907 = vtanh.pop %v805
        %v908 = vtanh.pop %v810
        %v909 = vtanh.pop %v813
        %v910 = vtanh.pop %v818
        %v911 = vtanh.pop %v821
        %v912 = vtanh.pop %v826
        %v913 = vtanh.pop %v829
        %v914 = vtanh.pop %v834
        %v915 = vtanh.pop %v837
        %v916 = vtanh.pop %v842
        %v917 = vtanh.pop %v845
        %v918 = vtanh.pop %v850
        %v919 = vtanh.pop %v853
        %v920 = vpack.c.bf16 %v857, %v856
        %v921 = vpack.c.bf16 %v859, %v858
        %v922 = vpack.c.bf16 %v861, %v860
        %v923 = vpack.c.bf16 %v863, %v862
        %v924 = vpack.c.bf16 %v865, %v864
        %v925 = vpack.c.bf16 %v867, %v866
        %v926 = vpack.c.bf16 %v869, %v868
        %v927 = vpack.c.bf16 %v871, %v870
        %v928 = vpack.c.bf16 %v873, %v872
        %v929 = vpack.c.bf16 %v875, %v874
        %v930 = vpack.c.bf16 %v877, %v876
        %v931 = vpack.c.bf16 %v879, %v878
        %v932 = vpack.c.bf16 %v881, %v880
        %v933 = vpack.c.bf16 %v883, %v882
        %v934 = vpack.c.bf16 %v885, %v884
        %v935 = vpack.c.bf16 %v887, %v886
        %v936 = vpack.c.bf16 %v889, %v888
        %v937 = vpack.c.bf16 %v891, %v890
        %v938 = vpack.c.bf16 %v893, %v892
        %v939 = vpack.c.bf16 %v895, %v894
        %v940 = vpack.c.bf16 %v897, %v896
        %v941 = vpack.c.bf16 %v899, %v898
        %v942 = vpack.c.bf16 %v901, %v900
        %v943 = vpack.c.bf16 %v903, %v902
        %v944 = vpack.c.bf16 %v905, %v904
        %v945 = vpack.c.bf16 %v907, %v906
        %v946 = vpack.c.bf16 %v909, %v908
        %v947 = vpack.c.bf16 %v911, %v910
        %v948 = vpack.c.bf16 %v913, %v912
        %v949 = vpack.c.bf16 %v915, %v914
        %v950 = vpack.c.bf16 %v917, %v916
        %v951 = vpack.c.bf16 %v919, %v918
        %v984 = vunpack.c.l.b16 %v920
        %v985 = vunpack.c.h.b16 %v920
        %v986 = vunpack.c.l.b16 %v921
        %v987 = vunpack.c.h.b16 %v921
        %v988 = vunpack.c.l.b16 %v922
        %v989 = vunpack.c.h.b16 %v922
        %v990 = vunpack.c.l.b16 %v923
        %v991 = vunpack.c.h.b16 %v923
        %v992 = vunpack.c.l.b16 %v924
        %v993 = vunpack.c.h.b16 %v924
        %v994 = vunpack.c.l.b16 %v925
        %v995 = vunpack.c.h.b16 %v925
        %v996 = vunpack.c.l.b16 %v926
        %v997 = vunpack.c.h.b16 %v926
        %v998 = vunpack.c.l.b16 %v927
        %v999 = vunpack.c.h.b16 %v927
        %v1000 = vunpack.c.l.b16 %v928
        %v1001 = vunpack.c.h.b16 %v928
        %v1002 = vunpack.c.l.b16 %v929
        %v1003 = vunpack.c.h.b16 %v929
        %v1004 = vunpack.c.l.b16 %v930
        %v1005 = vunpack.c.h.b16 %v930
        %v1006 = vunpack.c.l.b16 %v931
        %v1007 = vunpack.c.h.b16 %v931
        %v1008 = vunpack.c.l.b16 %v932
        %v1009 = vunpack.c.h.b16 %v932
        %v1010 = vunpack.c.l.b16 %v933
        %v1011 = vunpack.c.h.b16 %v933
        %v1012 = vunpack.c.l.b16 %v934
        %v1013 = vunpack.c.h.b16 %v934
        %v1014 = vunpack.c.l.b16 %v935
        %v1015 = vunpack.c.h.b16 %v935
        %v1016 = vunpack.c.l.b16 %v936
        %v1017 = vunpack.c.h.b16 %v936
        %v1018 = vunpack.c.l.b16 %v937
        %v1019 = vunpack.c.h.b16 %v937
        %v1020 = vunpack.c.l.b16 %v938
        %v1021 = vunpack.c.h.b16 %v938
        %v1022 = vunpack.c.l.b16 %v939
        %v1023 = vunpack.c.h.b16 %v939
        %v1024 = vunpack.c.l.b16 %v940
        %v1025 = vunpack.c.h.b16 %v940
        %v1026 = vunpack.c.l.b16 %v941
        %v1027 = vunpack.c.h.b16 %v941
        %v1028 = vunpack.c.l.b16 %v942
        %v1029 = vunpack.c.h.b16 %v942
        %v1030 = vunpack.c.l.b16 %v943
        %v1031 = vunpack.c.h.b16 %v943
        %v1032 = vunpack.c.l.b16 %v944
        %v1033 = vunpack.c.h.b16 %v944
        %v1034 = vunpack.c.l.b16 %v945
        %v1035 = vunpack.c.h.b16 %v945
        %v1036 = vunpack.c.l.b16 %v946
        %v1037 = vunpack.c.h.b16 %v946
        %v1038 = vunpack.c.l.b16 %v947
        %v1039 = vunpack.c.h.b16 %v947
        %v1040 = vunpack.c.l.b16 %v948
        %v1041 = vunpack.c.h.b16 %v948
        %v1042 = vunpack.c.l.b16 %v949
        %v1043 = vunpack.c.h.b16 %v949
        %v1044 = vunpack.c.l.b16 %v950
        %v1045 = vunpack.c.h.b16 %v950
        %v1046 = vunpack.c.l.b16 %v951
        %v1047 = vunpack.c.h.b16 %v951
        %v1048 = vpack.c.b16 %v984, %v984
        %v1049 = vpack.c.b16 %v985, %v985
        %v1050 = vpack.c.b16 %v986, %v986
        %v1051 = vpack.c.b16 %v987, %v987
        %v1052 = vpack.c.b16 %v988, %v988
        %v1053 = vpack.c.b16 %v989, %v989
        %v1054 = vpack.c.b16 %v990, %v990
        %v1055 = vpack.c.b16 %v991, %v991
        %v1056 = vpack.c.b16 %v992, %v992
        %v1057 = vpack.c.b16 %v993, %v993
        %v1058 = vpack.c.b16 %v994, %v994
        %v1059 = vpack.c.b16 %v995, %v995
        %v1060 = vpack.c.b16 %v996, %v996
        %v1061 = vpack.c.b16 %v997, %v997
        %v1062 = vpack.c.b16 %v998, %v998
        %v1063 = vpack.c.b16 %v999, %v999
        %v1064 = vpack.c.b16 %v1000, %v1000
        %v1065 = vpack.c.b16 %v1001, %v1001
        %v1066 = vpack.c.b16 %v1002, %v1002
        %v1067 = vpack.c.b16 %v1003, %v1003
        %v1068 = vpack.c.b16 %v1004, %v1004
        %v1069 = vpack.c.b16 %v1005, %v1005
        %v1070 = vpack.c.b16 %v1006, %v1006
        %v1071 = vpack.c.b16 %v1007, %v1007
        %v1072 = vpack.c.b16 %v1008, %v1008
        %v1073 = vpack.c.b16 %v1009, %v1009
        %v1074 = vpack.c.b16 %v1010, %v1010
        %v1075 = vpack.c.b16 %v1011, %v1011
        %v1076 = vpack.c.b16 %v1012, %v1012
        %v1077 = vpack.c.b16 %v1013, %v1013
        %v1078 = vpack.c.b16 %v1014, %v1014
        %v1079 = vpack.c.b16 %v1015, %v1015
        %v1080 = vpack.c.b16 %v1016, %v1016
        %v1081 = vpack.c.b16 %v1017, %v1017
        %v1082 = vpack.c.b16 %v1018, %v1018
        %v1083 = vpack.c.b16 %v1019, %v1019
        %v1084 = vpack.c.b16 %v1020, %v1020
        %v1085 = vpack.c.b16 %v1021, %v1021
        %v1086 = vpack.c.b16 %v1022, %v1022
        %v1087 = vpack.c.b16 %v1023, %v1023
        %v1088 = vpack.c.b16 %v1024, %v1024
        %v1089 = vpack.c.b16 %v1025, %v1025
        %v1090 = vpack.c.b16 %v1026, %v1026
        %v1091 = vpack.c.b16 %v1027, %v1027
        %v1092 = vpack.c.b16 %v1028, %v1028
        %v1093 = vpack.c.b16 %v1029, %v1029
        %v1094 = vpack.c.b16 %v1030, %v1030
        %v1095 = vpack.c.b16 %v1031, %v1031
        %v1096 = vpack.c.b16 %v1032, %v1032
        %v1097 = vpack.c.b16 %v1033, %v1033
        %v1098 = vpack.c.b16 %v1034, %v1034
        %v1099 = vpack.c.b16 %v1035, %v1035
        %v1100 = vpack.c.b16 %v1036, %v1036
        %v1101 = vpack.c.b16 %v1037, %v1037
        %v1102 = vpack.c.b16 %v1038, %v1038
        %v1103 = vpack.c.b16 %v1039, %v1039
        %v1104 = vpack.c.b16 %v1040, %v1040
        %v1105 = vpack.c.b16 %v1041, %v1041
        %v1106 = vpack.c.b16 %v1042, %v1042
        %v1107 = vpack.c.b16 %v1043, %v1043
        %v1108 = vpack.c.b16 %v1044, %v1044
        %v1109 = vpack.c.b16 %v1045, %v1045
        %v1110 = vpack.c.b16 %v1046, %v1046
        %v1111 = vpack.c.b16 %v1047, %v1047
        %1176 = vst [vmem:[%s172] sm:$0xf] %v1048
        %1177 = vst [vmem:[%s172 + $0x4] sm:$0xf] %v1049
        %1178 = vst [vmem:[%s172 + $0x8] sm:$0xf] %v1050
        %1179 = vst [vmem:[%s172 + $0xc] sm:$0xf] %v1051
        %1180 = vst [vmem:[%s172 + $0x10] sm:$0xf] %v1052
        %1181 = vst [vmem:[%s172 + $0x14] sm:$0xf] %v1053
        %1182 = vst [vmem:[%s172 + $0x18] sm:$0xf] %v1054
        %1183 = vst [vmem:[%s172 + $0x1c] sm:$0xf] %v1055
        %1184 = vst [vmem:[%s172 + $0x20] sm:$0xf] %v1056
        %1185 = vst [vmem:[%s172 + $0x24] sm:$0xf] %v1057
        %1186 = vst [vmem:[%s172 + $0x28] sm:$0xf] %v1058
        %1187 = vst [vmem:[%s172 + $0x2c] sm:$0xf] %v1059
        %1188 = vst [vmem:[%s172 + $0x30] sm:$0xf] %v1060
        %1189 = vst [vmem:[%s172 + $0x34] sm:$0xf] %v1061
        %1190 = vst [vmem:[%s172 + $0x38] sm:$0xf] %v1062
        %1191 = vst [vmem:[%s172 + $0x3c] sm:$0xf] %v1063
        %1192 = vst [vmem:[%s172 + $0x40] sm:$0xf] %v1064
        %1193 = vst [vmem:[%s172 + $0x44] sm:$0xf] %v1065
        %1194 = vst [vmem:[%s172 + $0x48] sm:$0xf] %v1066
        %1195 = vst [vmem:[%s172 + $0x4c] sm:$0xf] %v1067
        %1196 = vst [vmem:[%s172 + $0x50] sm:$0xf] %v1068
        %1197 = vst [vmem:[%s172 + $0x54] sm:$0xf] %v1069
        %1198 = vst [vmem:[%s172 + $0x58] sm:$0xf] %v1070
        %1199 = vst [vmem:[%s172 + $0x5c] sm:$0xf] %v1071
        %1200 = vst [vmem:[%s172 + $0x60] sm:$0xf] %v1072
        %1201 = vst [vmem:[%s172 + $0x64] sm:$0xf] %v1073
        %1202 = vst [vmem:[%s172 + $0x68] sm:$0xf] %v1074
        %1203 = vst [vmem:[%s172 + $0x6c] sm:$0xf] %v1075
        %1204 = vst [vmem:[%s172 + $0x70] sm:$0xf] %v1076
        %1205 = vst [vmem:[%s172 + $0x74] sm:$0xf] %v1077
        %1206 = vst [vmem:[%s172 + $0x78] sm:$0xf] %v1078
        %1207 = vst [vmem:[%s172 + $0x7c] sm:$0xf] %v1079
        %1208 = vst [vmem:[%s172 + $0x80] sm:$0xf] %v1080
        %1209 = vst [vmem:[%s172 + $0x84] sm:$0xf] %v1081
        %1210 = vst [vmem:[%s172 + $0x88] sm:$0xf] %v1082
        %1211 = vst [vmem:[%s172 + $0x8c] sm:$0xf] %v1083
        %1212 = vst [vmem:[%s172 + $0x90] sm:$0xf] %v1084
        %1213 = vst [vmem:[%s172 + $0x94] sm:$0xf] %v1085
        %1214 = vst [vmem:[%s172 + $0x98] sm:$0xf] %v1086
        %1215 = vst [vmem:[%s172 + $0x9c] sm:$0xf] %v1087
        %1216 = vst [vmem:[%s172 + $0xa0] sm:$0xf] %v1088
        %1217 = vst [vmem:[%s172 + $0xa4] sm:$0xf] %v1089
        %1218 = vst [vmem:[%s172 + $0xa8] sm:$0xf] %v1090
        %1219 = vst [vmem:[%s172 + $0xac] sm:$0xf] %v1091
        %1220 = vst [vmem:[%s172 + $0xb0] sm:$0xf] %v1092
        %1221 = vst [vmem:[%s172 + $0xb4] sm:$0xf] %v1093
        %1222 = vst [vmem:[%s172 + $0xb8] sm:$0xf] %v1094
        %1223 = vst [vmem:[%s172 + $0xbc] sm:$0xf] %v1095
        %1224 = vst [vmem:[%s172 + $0xc0] sm:$0xf] %v1096
        %1225 = vst [vmem:[%s172 + $0xc4] sm:$0xf] %v1097
        %1226 = vst [vmem:[%s172 + $0xc8] sm:$0xf] %v1098
        %1227 = vst [vmem:[%s172 + $0xcc] sm:$0xf] %v1099
        %1228 = vst [vmem:[%s172 + $0xd0] sm:$0xf] %v1100
        %1229 = vst [vmem:[%s172 + $0xd4] sm:$0xf] %v1101
        %1230 = vst [vmem:[%s172 + $0xd8] sm:$0xf] %v1102
        %1231 = vst [vmem:[%s172 + $0xdc] sm:$0xf] %v1103
        %1232 = vst [vmem:[%s172 + $0xe0] sm:$0xf] %v1104
        %1233 = vst [vmem:[%s172 + $0xe4] sm:$0xf] %v1105
        %1234 = vst [vmem:[%s172 + $0xe8] sm:$0xf] %v1106
        %1235 = vst [vmem:[%s172 + $0xec] sm:$0xf] %v1107
        %1236 = vst [vmem:[%s172 + $0xf0] sm:$0xf] %v1108
        %1237 = vst [vmem:[%s172 + $0xf4] sm:$0xf] %v1109
        %1238 = vst [vmem:[%s172 + $0xf8] sm:$0xf] %v1110
        %1239 = vst [vmem:[%s172 + $0xfc] sm:$0xf] %v1111
        %s1240 = sand.u32 %s90, 1
        %s1241 = sand.u32 %s90, 1
        %s1242 = smul.addr %s1241, 256
        %s1243 = scalar_lea.vmem [#allocation2], %s1242
        // Predicated region
        $region33: #{lenet_forward.3} parent=31 // pred_check
          %p1244 = pneg %p100
        $region34: #{lenet_forward.3} parent=31 // pred_check_branch
          %1246 = sbr.rel (%p1244) target = $region36
        $region35: #{lenet_forward.3} parent=31 // pred_region
          %s1247 = smul.u32 64, %s14
          %s1248 = ssub.s32 196, %s1247
          %p1249 = scmp.lt.s32.totalorder %s1248, 64
          %s1250 = scalar_select %p1249, %s1248, 64
          %s1251 = smul.u32 64, %s1250
          %p1252 = scmp.ne.s32.totalorder 0, %s1251
          %s1253 = smul.addr %s1247, 4
          %s1254 = scalar_lea.vmem %s3, %s1253
          // Predicated region
          $region37: #{lenet_forward.3} parent=35 // pred_check
            %p1255 = pneg %p1252
          $region38: #{lenet_forward.3} parent=35 // pred_check_branch
            %1257 = sbr.rel (%p1255) target = $region40
          $region39: #{lenet_forward.3} parent=35 // pred_region
            // Predicated region
            $region41: #{lenet_forward.3} parent=39 // pred_check
              _
            $region42: #{lenet_forward.3} parent=39 // pred_check_branch
              %1259 = sbr.rel target = $region44
            $region43: #{lenet_forward.3} parent=39 // pred_region
              // Predicated region
              $region63: #{lenet_forward.3} parent=43 // pred_check
                _
              $region64: #{lenet_forward.3} parent=43 // pred_check_branch
                %1434 = sbr.rel (0) target = $region66
              $region65: #{lenet_forward.3} parent=43 // pred_region
                %s1436 = sshrl.u32 %s1250, 6
                // While loop
                $region67: #{lenet_forward.3} parent=65 // loop_pre_header
                  _
                $region68: #{lenet_forward.3} parent=65 // loop_header
                  %s1438 = sphi 0, %s1440
                  %p1439 = scmp.ge.s32.totalorder %s1438, %s1436
                  %s1443 = sphi 0, %s1576
                  %s1444 = sphi %s1243, %s1579
                  %s1445 = sphi %s1254, %s1580
                $region69: #{lenet_forward.3} parent=65 // loop_header_branch
                  %1442 = sbr.rel (%p1439) target = $region73
                $region70: #{lenet_forward.3} parent=65 // loop_body
                  %v1446 = vld [vmem:[%s1444] sm:$0xf]
                  %1447 = vst [vmem:[%s1445] sm:$0xf] %v1446
                  %v1448 = vld [vmem:[%s1444 + $0x4] sm:$0xf]
                  %1449 = vst [vmem:[%s1445 + $0x4] sm:$0xf] %v1448
                  %v1450 = vld [vmem:[%s1444 + $0x8] sm:$0xf]
                  %1451 = vst [vmem:[%s1445 + $0x8] sm:$0xf] %v1450
                  %v1452 = vld [vmem:[%s1444 + $0xc] sm:$0xf]
                  %1453 = vst [vmem:[%s1445 + $0xc] sm:$0xf] %v1452
                  %v1454 = vld [vmem:[%s1444 + $0x10] sm:$0xf]
                  %1455 = vst [vmem:[%s1445 + $0x10] sm:$0xf] %v1454
                  %v1456 = vld [vmem:[%s1444 + $0x14] sm:$0xf]
                  %1457 = vst [vmem:[%s1445 + $0x14] sm:$0xf] %v1456
                  %v1458 = vld [vmem:[%s1444 + $0x18] sm:$0xf]
                  %1459 = vst [vmem:[%s1445 + $0x18] sm:$0xf] %v1458
                  %v1460 = vld [vmem:[%s1444 + $0x1c] sm:$0xf]
                  %1461 = vst [vmem:[%s1445 + $0x1c] sm:$0xf] %v1460
                  %v1462 = vld [vmem:[%s1444 + $0x20] sm:$0xf]
                  %1463 = vst [vmem:[%s1445 + $0x20] sm:$0xf] %v1462
                  %v1464 = vld [vmem:[%s1444 + $0x24] sm:$0xf]
                  %1465 = vst [vmem:[%s1445 + $0x24] sm:$0xf] %v1464
                  %v1466 = vld [vmem:[%s1444 + $0x28] sm:$0xf]
                  %1467 = vst [vmem:[%s1445 + $0x28] sm:$0xf] %v1466
                  %v1468 = vld [vmem:[%s1444 + $0x2c] sm:$0xf]
                  %1469 = vst [vmem:[%s1445 + $0x2c] sm:$0xf] %v1468
                  %v1470 = vld [vmem:[%s1444 + $0x30] sm:$0xf]
                  %1471 = vst [vmem:[%s1445 + $0x30] sm:$0xf] %v1470
                  %v1472 = vld [vmem:[%s1444 + $0x34] sm:$0xf]
                  %1473 = vst [vmem:[%s1445 + $0x34] sm:$0xf] %v1472
                  %v1474 = vld [vmem:[%s1444 + $0x38] sm:$0xf]
                  %1475 = vst [vmem:[%s1445 + $0x38] sm:$0xf] %v1474
                  %v1476 = vld [vmem:[%s1444 + $0x3c] sm:$0xf]
                  %1477 = vst [vmem:[%s1445 + $0x3c] sm:$0xf] %v1476
                  %v1478 = vld [vmem:[%s1444 + $0x40] sm:$0xf]
                  %1479 = vst [vmem:[%s1445 + $0x40] sm:$0xf] %v1478
                  %v1480 = vld [vmem:[%s1444 + $0x44] sm:$0xf]
                  %1481 = vst [vmem:[%s1445 + $0x44] sm:$0xf] %v1480
                  %v1482 = vld [vmem:[%s1444 + $0x48] sm:$0xf]
                  %1483 = vst [vmem:[%s1445 + $0x48] sm:$0xf] %v1482
                  %v1484 = vld [vmem:[%s1444 + $0x4c] sm:$0xf]
                  %1485 = vst [vmem:[%s1445 + $0x4c] sm:$0xf] %v1484
                  %v1486 = vld [vmem:[%s1444 + $0x50] sm:$0xf]
                  %1487 = vst [vmem:[%s1445 + $0x50] sm:$0xf] %v1486
                  %v1488 = vld [vmem:[%s1444 + $0x54] sm:$0xf]
                  %1489 = vst [vmem:[%s1445 + $0x54] sm:$0xf] %v1488
                  %v1490 = vld [vmem:[%s1444 + $0x58] sm:$0xf]
                  %1491 = vst [vmem:[%s1445 + $0x58] sm:$0xf] %v1490
                  %v1492 = vld [vmem:[%s1444 + $0x5c] sm:$0xf]
                  %1493 = vst [vmem:[%s1445 + $0x5c] sm:$0xf] %v1492
                  %v1494 = vld [vmem:[%s1444 + $0x60] sm:$0xf]
                  %1495 = vst [vmem:[%s1445 + $0x60] sm:$0xf] %v1494
                  %v1496 = vld [vmem:[%s1444 + $0x64] sm:$0xf]
                  %1497 = vst [vmem:[%s1445 + $0x64] sm:$0xf] %v1496
                  %v1498 = vld [vmem:[%s1444 + $0x68] sm:$0xf]
                  %1499 = vst [vmem:[%s1445 + $0x68] sm:$0xf] %v1498
                  %v1500 = vld [vmem:[%s1444 + $0x6c] sm:$0xf]
                  %1501 = vst [vmem:[%s1445 + $0x6c] sm:$0xf] %v1500
                  %v1502 = vld [vmem:[%s1444 + $0x70] sm:$0xf]
                  %1503 = vst [vmem:[%s1445 + $0x70] sm:$0xf] %v1502
                  %v1504 = vld [vmem:[%s1444 + $0x74] sm:$0xf]
                  %1505 = vst [vmem:[%s1445 + $0x74] sm:$0xf] %v1504
                  %v1506 = vld [vmem:[%s1444 + $0x78] sm:$0xf]
                  %1507 = vst [vmem:[%s1445 + $0x78] sm:$0xf] %v1506
                  %v1508 = vld [vmem:[%s1444 + $0x7c] sm:$0xf]
                  %1509 = vst [vmem:[%s1445 + $0x7c] sm:$0xf] %v1508
                  %v1510 = vld [vmem:[%s1444 + $0x80] sm:$0xf]
                  %1511 = vst [vmem:[%s1445 + $0x80] sm:$0xf] %v1510
                  %v1512 = vld [vmem:[%s1444 + $0x84] sm:$0xf]
                  %1513 = vst [vmem:[%s1445 + $0x84] sm:$0xf] %v1512
                  %v1514 = vld [vmem:[%s1444 + $0x88] sm:$0xf]
                  %1515 = vst [vmem:[%s1445 + $0x88] sm:$0xf] %v1514
                  %v1516 = vld [vmem:[%s1444 + $0x8c] sm:$0xf]
                  %1517 = vst [vmem:[%s1445 + $0x8c] sm:$0xf] %v1516
                  %v1518 = vld [vmem:[%s1444 + $0x90] sm:$0xf]
                  %1519 = vst [vmem:[%s1445 + $0x90] sm:$0xf] %v1518
                  %v1520 = vld [vmem:[%s1444 + $0x94] sm:$0xf]
                  %1521 = vst [vmem:[%s1445 + $0x94] sm:$0xf] %v1520
                  %v1522 = vld [vmem:[%s1444 + $0x98] sm:$0xf]
                  %1523 = vst [vmem:[%s1445 + $0x98] sm:$0xf] %v1522
                  %v1524 = vld [vmem:[%s1444 + $0x9c] sm:$0xf]
                  %1525 = vst [vmem:[%s1445 + $0x9c] sm:$0xf] %v1524
                  %v1526 = vld [vmem:[%s1444 + $0xa0] sm:$0xf]
                  %1527 = vst [vmem:[%s1445 + $0xa0] sm:$0xf] %v1526
                  %v1528 = vld [vmem:[%s1444 + $0xa4] sm:$0xf]
                  %1529 = vst [vmem:[%s1445 + $0xa4] sm:$0xf] %v1528
                  %v1530 = vld [vmem:[%s1444 + $0xa8] sm:$0xf]
                  %1531 = vst [vmem:[%s1445 + $0xa8] sm:$0xf] %v1530
                  %v1532 = vld [vmem:[%s1444 + $0xac] sm:$0xf]
                  %1533 = vst [vmem:[%s1445 + $0xac] sm:$0xf] %v1532
                  %v1534 = vld [vmem:[%s1444 + $0xb0] sm:$0xf]
                  %1535 = vst [vmem:[%s1445 + $0xb0] sm:$0xf] %v1534
                  %v1536 = vld [vmem:[%s1444 + $0xb4] sm:$0xf]
                  %1537 = vst [vmem:[%s1445 + $0xb4] sm:$0xf] %v1536
                  %v1538 = vld [vmem:[%s1444 + $0xb8] sm:$0xf]
                  %1539 = vst [vmem:[%s1445 + $0xb8] sm:$0xf] %v1538
                  %v1540 = vld [vmem:[%s1444 + $0xbc] sm:$0xf]
                  %1541 = vst [vmem:[%s1445 + $0xbc] sm:$0xf] %v1540
                  %v1542 = vld [vmem:[%s1444 + $0xc0] sm:$0xf]
                  %1543 = vst [vmem:[%s1445 + $0xc0] sm:$0xf] %v1542
                  %v1544 = vld [vmem:[%s1444 + $0xc4] sm:$0xf]
                  %1545 = vst [vmem:[%s1445 + $0xc4] sm:$0xf] %v1544
                  %v1546 = vld [vmem:[%s1444 + $0xc8] sm:$0xf]
                  %1547 = vst [vmem:[%s1445 + $0xc8] sm:$0xf] %v1546
                  %v1548 = vld [vmem:[%s1444 + $0xcc] sm:$0xf]
                  %1549 = vst [vmem:[%s1445 + $0xcc] sm:$0xf] %v1548
                  %v1550 = vld [vmem:[%s1444 + $0xd0] sm:$0xf]
                  %1551 = vst [vmem:[%s1445 + $0xd0] sm:$0xf] %v1550
                  %v1552 = vld [vmem:[%s1444 + $0xd4] sm:$0xf]
                  %1553 = vst [vmem:[%s1445 + $0xd4] sm:$0xf] %v1552
                  %v1554 = vld [vmem:[%s1444 + $0xd8] sm:$0xf]
                  %1555 = vst [vmem:[%s1445 + $0xd8] sm:$0xf] %v1554
                  %v1556 = vld [vmem:[%s1444 + $0xdc] sm:$0xf]
                  %1557 = vst [vmem:[%s1445 + $0xdc] sm:$0xf] %v1556
                  %v1558 = vld [vmem:[%s1444 + $0xe0] sm:$0xf]
                  %1559 = vst [vmem:[%s1445 + $0xe0] sm:$0xf] %v1558
                  %v1560 = vld [vmem:[%s1444 + $0xe4] sm:$0xf]
                  %1561 = vst [vmem:[%s1445 + $0xe4] sm:$0xf] %v1560
                  %v1562 = vld [vmem:[%s1444 + $0xe8] sm:$0xf]
                  %1563 = vst [vmem:[%s1445 + $0xe8] sm:$0xf] %v1562
                  %v1564 = vld [vmem:[%s1444 + $0xec] sm:$0xf]
                  %1565 = vst [vmem:[%s1445 + $0xec] sm:$0xf] %v1564
                  %v1566 = vld [vmem:[%s1444 + $0xf0] sm:$0xf]
                  %1567 = vst [vmem:[%s1445 + $0xf0] sm:$0xf] %v1566
                  %v1568 = vld [vmem:[%s1444 + $0xf4] sm:$0xf]
                  %1569 = vst [vmem:[%s1445 + $0xf4] sm:$0xf] %v1568
                  %v1570 = vld [vmem:[%s1444 + $0xf8] sm:$0xf]
                  %1571 = vst [vmem:[%s1445 + $0xf8] sm:$0xf] %v1570
                  %v1572 = vld [vmem:[%s1444 + $0xfc] sm:$0xf]
                  %1573 = vst [vmem:[%s1445 + $0xfc] sm:$0xf] %v1572
                  %s1574 = sadd.s32 1, %s1443
                  %p1575 = scmp.ge.s32.totalorder %s1574, %s1436
                  %s1576 = scalar_select %p1575, 0, %s1574
                  %s1577 = smul.u32 %s1576, 256
                  %s1578 = smul.u32 %s1576, 256
                  %s1579 = scalar_lea.vmem %s1243, %s1577 [#allocation2]
                  %s1580 = scalar_lea.vmem %s1254, %s1578
                $region71: #{lenet_forward.3} parent=65 // loop_footer
                  %s1440 = sadd.s32 %s1438, 1
                $region72: #{lenet_forward.3} parent=65 // loop_footer_branch
                  %1437 = sbr.rel target = $region68
                $region73: #{lenet_forward.3} parent=65 // loop_exit
                  _
                %s1581 = sshrl.u32 %s1250, 6
                %s1582 = sand.u32 %s1250, 63
                %s1583 = smul.u32 %s1581, 64
                %s1584 = smul.u32 4, %s1583
                %s1585 = scalar_lea.vmem %s1243, %s1584 [#allocation2]
                %s1586 = smul.u32 4, %s1583
                %s1587 = scalar_lea.vmem %s1254, %s1586
                // While loop
                $region74: #{lenet_forward.3} parent=65 // loop_pre_header
                  _
                $region75: #{lenet_forward.3} parent=65 // loop_header
                  %s1589 = sphi 0, %s1591
                  %p1590 = scmp.ge.s32.totalorder %s1589, %s1582
                  %s1594 = sphi 0, %s1601
                  %s1595 = sphi %s1585, %s1604
                  %s1596 = sphi %s1587, %s1605
                $region76: #{lenet_forward.3} parent=65 // loop_header_branch
                  %1593 = sbr.rel (%p1590) target = $region80
                $region77: #{lenet_forward.3} parent=65 // loop_body
                  %v1597 = vld [vmem:[%s1595] sm:$0xf]
                  %1598 = vst [vmem:[%s1596] sm:$0xf] %v1597
                  %s1599 = sadd.s32 1, %s1594
                  %p1600 = scmp.ge.s32.totalorder %s1599, %s1582
                  %s1601 = scalar_select %p1600, 0, %s1599
                  %s1602 = smul.u32 %s1601, 4
                  %s1603 = smul.u32 %s1601, 4
                  %s1604 = scalar_lea.vmem %s1585, %s1602 [#allocation2]
                  %s1605 = scalar_lea.vmem %s1587, %s1603
                $region78: #{lenet_forward.3} parent=65 // loop_footer
                  %s1591 = sadd.s32 %s1589, 1
                $region79: #{lenet_forward.3} parent=65 // loop_footer_branch
                  %1588 = sbr.rel target = $region75
                $region80: #{lenet_forward.3} parent=65 // loop_exit
                  _
              $region66: #{lenet_forward.3} parent=43 // pred_fallthru
                _
            $region44: #{lenet_forward.3} parent=39 // pred_fallthru
              _
            // Predicated region
            $region45: #{lenet_forward.3} parent=39 // pred_check
              _
            $region46: #{lenet_forward.3} parent=39 // pred_check_branch
              %1261 = sbr.rel (0) target = $region48
            $region47: #{lenet_forward.3} parent=39 // pred_region
              %s1263 = sshrl.u32 %s1250, 6
              // While loop
              $region49: #{lenet_forward.3} parent=47 // loop_pre_header
                _
              $region50: #{lenet_forward.3} parent=47 // loop_header
                %s1265 = sphi 0, %s1267
                %p1266 = scmp.ge.s32.totalorder %s1265, %s1263
                %s1270 = sphi 0, %s1403
                %s1271 = sphi %s1243, %s1406
                %s1272 = sphi %s1254, %s1407
              $region51: #{lenet_forward.3} parent=47 // loop_header_branch
                %1269 = sbr.rel (%p1266) target = $region55
              $region52: #{lenet_forward.3} parent=47 // loop_body
                %v1273 = vld [vmem:[%s1271] sm:$0xf]
                %1274 = vst [vmem:[%s1272] sm:$0xf] %v1273
                %v1275 = vld [vmem:[%s1271 + $0x4] sm:$0xf]
                %1276 = vst [vmem:[%s1272 + $0x4] sm:$0xf] %v1275
                %v1277 = vld [vmem:[%s1271 + $0x8] sm:$0xf]
                %1278 = vst [vmem:[%s1272 + $0x8] sm:$0xf] %v1277
                %v1279 = vld [vmem:[%s1271 + $0xc] sm:$0xf]
                %1280 = vst [vmem:[%s1272 + $0xc] sm:$0xf] %v1279
                %v1281 = vld [vmem:[%s1271 + $0x10] sm:$0xf]
                %1282 = vst [vmem:[%s1272 + $0x10] sm:$0xf] %v1281
                %v1283 = vld [vmem:[%s1271 + $0x14] sm:$0xf]
                %1284 = vst [vmem:[%s1272 + $0x14] sm:$0xf] %v1283
                %v1285 = vld [vmem:[%s1271 + $0x18] sm:$0xf]
                %1286 = vst [vmem:[%s1272 + $0x18] sm:$0xf] %v1285
                %v1287 = vld [vmem:[%s1271 + $0x1c] sm:$0xf]
                %1288 = vst [vmem:[%s1272 + $0x1c] sm:$0xf] %v1287
                %v1289 = vld [vmem:[%s1271 + $0x20] sm:$0xf]
                %1290 = vst [vmem:[%s1272 + $0x20] sm:$0xf] %v1289
                %v1291 = vld [vmem:[%s1271 + $0x24] sm:$0xf]
                %1292 = vst [vmem:[%s1272 + $0x24] sm:$0xf] %v1291
                %v1293 = vld [vmem:[%s1271 + $0x28] sm:$0xf]
                %1294 = vst [vmem:[%s1272 + $0x28] sm:$0xf] %v1293
                %v1295 = vld [vmem:[%s1271 + $0x2c] sm:$0xf]
                %1296 = vst [vmem:[%s1272 + $0x2c] sm:$0xf] %v1295
                %v1297 = vld [vmem:[%s1271 + $0x30] sm:$0xf]
                %1298 = vst [vmem:[%s1272 + $0x30] sm:$0xf] %v1297
                %v1299 = vld [vmem:[%s1271 + $0x34] sm:$0xf]
                %1300 = vst [vmem:[%s1272 + $0x34] sm:$0xf] %v1299
                %v1301 = vld [vmem:[%s1271 + $0x38] sm:$0xf]
                %1302 = vst [vmem:[%s1272 + $0x38] sm:$0xf] %v1301
                %v1303 = vld [vmem:[%s1271 + $0x3c] sm:$0xf]
                %1304 = vst [vmem:[%s1272 + $0x3c] sm:$0xf] %v1303
                %v1305 = vld [vmem:[%s1271 + $0x40] sm:$0xf]
                %1306 = vst [vmem:[%s1272 + $0x40] sm:$0xf] %v1305
                %v1307 = vld [vmem:[%s1271 + $0x44] sm:$0xf]
                %1308 = vst [vmem:[%s1272 + $0x44] sm:$0xf] %v1307
                %v1309 = vld [vmem:[%s1271 + $0x48] sm:$0xf]
                %1310 = vst [vmem:[%s1272 + $0x48] sm:$0xf] %v1309
                %v1311 = vld [vmem:[%s1271 + $0x4c] sm:$0xf]
                %1312 = vst [vmem:[%s1272 + $0x4c] sm:$0xf] %v1311
                %v1313 = vld [vmem:[%s1271 + $0x50] sm:$0xf]
                %1314 = vst [vmem:[%s1272 + $0x50] sm:$0xf] %v1313
                %v1315 = vld [vmem:[%s1271 + $0x54] sm:$0xf]
                %1316 = vst [vmem:[%s1272 + $0x54] sm:$0xf] %v1315
                %v1317 = vld [vmem:[%s1271 + $0x58] sm:$0xf]
                %1318 = vst [vmem:[%s1272 + $0x58] sm:$0xf] %v1317
                %v1319 = vld [vmem:[%s1271 + $0x5c] sm:$0xf]
                %1320 = vst [vmem:[%s1272 + $0x5c] sm:$0xf] %v1319
                %v1321 = vld [vmem:[%s1271 + $0x60] sm:$0xf]
                %1322 = vst [vmem:[%s1272 + $0x60] sm:$0xf] %v1321
                %v1323 = vld [vmem:[%s1271 + $0x64] sm:$0xf]
                %1324 = vst [vmem:[%s1272 + $0x64] sm:$0xf] %v1323
                %v1325 = vld [vmem:[%s1271 + $0x68] sm:$0xf]
                %1326 = vst [vmem:[%s1272 + $0x68] sm:$0xf] %v1325
                %v1327 = vld [vmem:[%s1271 + $0x6c] sm:$0xf]
                %1328 = vst [vmem:[%s1272 + $0x6c] sm:$0xf] %v1327
                %v1329 = vld [vmem:[%s1271 + $0x70] sm:$0xf]
                %1330 = vst [vmem:[%s1272 + $0x70] sm:$0xf] %v1329
                %v1331 = vld [vmem:[%s1271 + $0x74] sm:$0xf]
                %1332 = vst [vmem:[%s1272 + $0x74] sm:$0xf] %v1331
                %v1333 = vld [vmem:[%s1271 + $0x78] sm:$0xf]
                %1334 = vst [vmem:[%s1272 + $0x78] sm:$0xf] %v1333
                %v1335 = vld [vmem:[%s1271 + $0x7c] sm:$0xf]
                %1336 = vst [vmem:[%s1272 + $0x7c] sm:$0xf] %v1335
                %v1337 = vld [vmem:[%s1271 + $0x80] sm:$0xf]
                %1338 = vst [vmem:[%s1272 + $0x80] sm:$0xf] %v1337
                %v1339 = vld [vmem:[%s1271 + $0x84] sm:$0xf]
                %1340 = vst [vmem:[%s1272 + $0x84] sm:$0xf] %v1339
                %v1341 = vld [vmem:[%s1271 + $0x88] sm:$0xf]
                %1342 = vst [vmem:[%s1272 + $0x88] sm:$0xf] %v1341
                %v1343 = vld [vmem:[%s1271 + $0x8c] sm:$0xf]
                %1344 = vst [vmem:[%s1272 + $0x8c] sm:$0xf] %v1343
                %v1345 = vld [vmem:[%s1271 + $0x90] sm:$0xf]
                %1346 = vst [vmem:[%s1272 + $0x90] sm:$0xf] %v1345
                %v1347 = vld [vmem:[%s1271 + $0x94] sm:$0xf]
                %1348 = vst [vmem:[%s1272 + $0x94] sm:$0xf] %v1347
                %v1349 = vld [vmem:[%s1271 + $0x98] sm:$0xf]
                %1350 = vst [vmem:[%s1272 + $0x98] sm:$0xf] %v1349
                %v1351 = vld [vmem:[%s1271 + $0x9c] sm:$0xf]
                %1352 = vst [vmem:[%s1272 + $0x9c] sm:$0xf] %v1351
                %v1353 = vld [vmem:[%s1271 + $0xa0] sm:$0xf]
                %1354 = vst [vmem:[%s1272 + $0xa0] sm:$0xf] %v1353
                %v1355 = vld [vmem:[%s1271 + $0xa4] sm:$0xf]
                %1356 = vst [vmem:[%s1272 + $0xa4] sm:$0xf] %v1355
                %v1357 = vld [vmem:[%s1271 + $0xa8] sm:$0xf]
                %1358 = vst [vmem:[%s1272 + $0xa8] sm:$0xf] %v1357
                %v1359 = vld [vmem:[%s1271 + $0xac] sm:$0xf]
                %1360 = vst [vmem:[%s1272 + $0xac] sm:$0xf] %v1359
                %v1361 = vld [vmem:[%s1271 + $0xb0] sm:$0xf]
                %1362 = vst [vmem:[%s1272 + $0xb0] sm:$0xf] %v1361
                %v1363 = vld [vmem:[%s1271 + $0xb4] sm:$0xf]
                %1364 = vst [vmem:[%s1272 + $0xb4] sm:$0xf] %v1363
                %v1365 = vld [vmem:[%s1271 + $0xb8] sm:$0xf]
                %1366 = vst [vmem:[%s1272 + $0xb8] sm:$0xf] %v1365
                %v1367 = vld [vmem:[%s1271 + $0xbc] sm:$0xf]
                %1368 = vst [vmem:[%s1272 + $0xbc] sm:$0xf] %v1367
                %v1369 = vld [vmem:[%s1271 + $0xc0] sm:$0xf]
                %1370 = vst [vmem:[%s1272 + $0xc0] sm:$0xf] %v1369
                %v1371 = vld [vmem:[%s1271 + $0xc4] sm:$0xf]
                %1372 = vst [vmem:[%s1272 + $0xc4] sm:$0xf] %v1371
                %v1373 = vld [vmem:[%s1271 + $0xc8] sm:$0xf]
                %1374 = vst [vmem:[%s1272 + $0xc8] sm:$0xf] %v1373
                %v1375 = vld [vmem:[%s1271 + $0xcc] sm:$0xf]
                %1376 = vst [vmem:[%s1272 + $0xcc] sm:$0xf] %v1375
                %v1377 = vld [vmem:[%s1271 + $0xd0] sm:$0xf]
                %1378 = vst [vmem:[%s1272 + $0xd0] sm:$0xf] %v1377
                %v1379 = vld [vmem:[%s1271 + $0xd4] sm:$0xf]
                %1380 = vst [vmem:[%s1272 + $0xd4] sm:$0xf] %v1379
                %v1381 = vld [vmem:[%s1271 + $0xd8] sm:$0xf]
                %1382 = vst [vmem:[%s1272 + $0xd8] sm:$0xf] %v1381
                %v1383 = vld [vmem:[%s1271 + $0xdc] sm:$0xf]
                %1384 = vst [vmem:[%s1272 + $0xdc] sm:$0xf] %v1383
                %v1385 = vld [vmem:[%s1271 + $0xe0] sm:$0xf]
                %1386 = vst [vmem:[%s1272 + $0xe0] sm:$0xf] %v1385
                %v1387 = vld [vmem:[%s1271 + $0xe4] sm:$0xf]
                %1388 = vst [vmem:[%s1272 + $0xe4] sm:$0xf] %v1387
                %v1389 = vld [vmem:[%s1271 + $0xe8] sm:$0xf]
                %1390 = vst [vmem:[%s1272 + $0xe8] sm:$0xf] %v1389
                %v1391 = vld [vmem:[%s1271 + $0xec] sm:$0xf]
                %1392 = vst [vmem:[%s1272 + $0xec] sm:$0xf] %v1391
                %v1393 = vld [vmem:[%s1271 + $0xf0] sm:$0xf]
                %1394 = vst [vmem:[%s1272 + $0xf0] sm:$0xf] %v1393
                %v1395 = vld [vmem:[%s1271 + $0xf4] sm:$0xf]
                %1396 = vst [vmem:[%s1272 + $0xf4] sm:$0xf] %v1395
                %v1397 = vld [vmem:[%s1271 + $0xf8] sm:$0xf]
                %1398 = vst [vmem:[%s1272 + $0xf8] sm:$0xf] %v1397
                %v1399 = vld [vmem:[%s1271 + $0xfc] sm:$0xf]
                %1400 = vst [vmem:[%s1272 + $0xfc] sm:$0xf] %v1399
                %s1401 = sadd.s32 1, %s1270
                %p1402 = scmp.ge.s32.totalorder %s1401, %s1263
                %s1403 = scalar_select %p1402, 0, %s1401
                %s1404 = smul.u32 %s1403, 256
                %s1405 = smul.u32 %s1403, 256
                %s1406 = scalar_lea.vmem %s1243, %s1404 [#allocation2]
                %s1407 = scalar_lea.vmem %s1254, %s1405
              $region53: #{lenet_forward.3} parent=47 // loop_footer
                %s1267 = sadd.s32 %s1265, 1
              $region54: #{lenet_forward.3} parent=47 // loop_footer_branch
                %1264 = sbr.rel target = $region50
              $region55: #{lenet_forward.3} parent=47 // loop_exit
                _
              %s1408 = sshrl.u32 %s1250, 6
              %s1409 = sand.u32 %s1250, 63
              %s1410 = smul.u32 %s1408, 64
              %s1411 = smul.u32 4, %s1410
              %s1412 = scalar_lea.vmem %s1243, %s1411 [#allocation2]
              %s1413 = smul.u32 4, %s1410
              %s1414 = scalar_lea.vmem %s1254, %s1413
              // While loop
              $region56: #{lenet_forward.3} parent=47 // loop_pre_header
                _
              $region57: #{lenet_forward.3} parent=47 // loop_header
                %s1416 = sphi 0, %s1418
                %p1417 = scmp.ge.s32.totalorder %s1416, %s1409
                %s1421 = sphi 0, %s1428
                %s1422 = sphi %s1412, %s1431
                %s1423 = sphi %s1414, %s1432
              $region58: #{lenet_forward.3} parent=47 // loop_header_branch
                %1420 = sbr.rel (%p1417) target = $region62
              $region59: #{lenet_forward.3} parent=47 // loop_body
                %v1424 = vld [vmem:[%s1422] sm:$0xf]
                %1425 = vst [vmem:[%s1423] sm:$0xf] %v1424
                %s1426 = sadd.s32 1, %s1421
                %p1427 = scmp.ge.s32.totalorder %s1426, %s1409
                %s1428 = scalar_select %p1427, 0, %s1426
                %s1429 = smul.u32 %s1428, 4
                %s1430 = smul.u32 %s1428, 4
                %s1431 = scalar_lea.vmem %s1412, %s1429 [#allocation2]
                %s1432 = scalar_lea.vmem %s1414, %s1430
              $region60: #{lenet_forward.3} parent=47 // loop_footer
                %s1418 = sadd.s32 %s1416, 1
              $region61: #{lenet_forward.3} parent=47 // loop_footer_branch
                %1415 = sbr.rel target = $region57
              $region62: #{lenet_forward.3} parent=47 // loop_exit
                _
            $region48: #{lenet_forward.3} parent=39 // pred_fallthru
              _
          $region40: #{lenet_forward.3} parent=35 // pred_fallthru
            _
          %1606 = vnop
        $region36: #{lenet_forward.3} parent=31 // pred_fallthru
          _
      $region32: #{lenet_forward.3} parent=5 // pred_fallthru
        _
      %p1607 = scmp.le.s32.totalorder 2, %s9
      // Predicated region
      $region81: #{lenet_forward.3} parent=5 // pred_check
        %p1608 = pneg %p1607
      $region82: #{lenet_forward.3} parent=5 // pred_check_branch
        %1610 = sbr.rel (%p1608) target = $region84
      $region83: #{lenet_forward.3} parent=5 // pred_region
        %s1611 = ssub.s32 %s9, 2
        // Predicated region
        $region85: #{lenet_forward.3} parent=83 // pred_check
          %p1612 = pneg %p106
        $region86: #{lenet_forward.3} parent=83 // pred_check_branch
          %1614 = sbr.rel (%p1612) target = $region88
        $region87: #{lenet_forward.3} parent=83 // pred_region
          %s1615 = sand.u32 %s91, 1
          %s1616 = sand.u32 %s91, 1
          %s1617 = smul.addr %s1616, 256
          %s1618 = scalar_lea.vmem [#allocation2], %s1617
        $region88: #{lenet_forward.3} parent=83 // pred_fallthru
          _
      $region84: #{lenet_forward.3} parent=5 // pred_fallthru
        _
    $region6: #{lenet_forward.3} parent=1 // loop_footer
      %s13 = sadd.s32 1, %s9
    $region7: #{lenet_forward.3} parent=1 // loop_footer_branch
      %8 = sbr.rel target = $region3
    $region8: #{lenet_forward.3} parent=1 // loop_exit
      _

// kernel: lenet_forward.4
$region0: #{lenet_forward.4}
  #allocation0 [shape = 'u32[]', space=smem, size = 0x4, offset = 0x4, fixed_abs, tag = 'smem constant byte address 0x4 - core index']
  #allocation1 [shape = 'u32[144,128]{1,0:T(1,128)}', space=vmem, size = 0x12000, scoped, tag = 'internal scratch']
  %s0 = inlined_call_operand.vmem [shape: bf16[200,150], index: 0, kind: input, shape index: {}]
  %s1 = inlined_call_operand.vmem [shape: bf16[150,128], index: 1, kind: input, shape index: {}]
  %s2 = inlined_call_operand.vmem [shape: f32[1,128], index: 2, kind: input, shape index: {}]
  %s3 = inlined_call_operand.vmem [shape: bf16[200,128], index: 3, kind: output, shape index: {}]
  %s4 = sld [smem:[#allocation0]]
  $region22: #{lenet_forward.4} parent=0
    _
  %s6 = ssub.s32 1, %s4
  %s7 = scalar_select 0, %s6, %s4
  // Predicated region
  $region2: #{lenet_forward.4} parent=0 // pred_check
    _
  $region3: #{lenet_forward.4} parent=0 // pred_check_branch
    %9 = sbr.rel (0) target = $region5
  $region4: #{lenet_forward.4} parent=0 // pred_region
    _
  $region5: #{lenet_forward.4} parent=0 // pred_fallthru
    _
  // Predicated region
  $region6: #{lenet_forward.4} parent=0 // pred_check
    _
  $region7: #{lenet_forward.4} parent=0 // pred_check_branch
    %11 = sbr.rel (0) target = $region9
  $region8: #{lenet_forward.4} parent=0 // pred_region
    _
  $region9: #{lenet_forward.4} parent=0 // pred_fallthru
    _
  // Predicated region
  $region10: #{lenet_forward.4} parent=0 // pred_check
    _
  $region11: #{lenet_forward.4} parent=0 // pred_check_branch
    %13 = sbr.rel (0) target = $region13
  $region12: #{lenet_forward.4} parent=0 // pred_region
    _
  $region13: #{lenet_forward.4} parent=0 // pred_fallthru
    _
  %v15 = vld [vmem:[%s0] sm:$0xff]
  %v16 = vld [vmem:[%s0 + $0x8] sm:$0xff]
  %v17 = vld [vmem:[%s0 + $0x10] sm:$0xff]
  %v18 = vld [vmem:[%s0 + $0x18] sm:$0xff]
  %v19 = vld [vmem:[%s0 + $0x20] sm:$0xff]
  %v20 = vld [vmem:[%s0 + $0x28] sm:$0xff]
  %v21 = vld [vmem:[%s0 + $0x30] sm:$0xff]
  %v22 = vld [vmem:[%s0 + $0x38] sm:$0xff]
  %v23 = vld [vmem:[%s0 + $0x40] sm:$0xff]
  %v24 = vld [vmem:[%s0 + $0x48] sm:$0xff]
  %v25 = vld [vmem:[%s0 + $0x50] sm:$0xff]
  %v26 = vld [vmem:[%s0 + $0x58] sm:$0xff]
  %v27 = vld [vmem:[%s0 + $0x60] sm:$0xff]
  %v28 = vld [vmem:[%s0 + $0x68] sm:$0xff]
  %v29 = vld [vmem:[%s0 + $0x70] sm:$0xff]
  %v30 = vld [vmem:[%s0 + $0x78] sm:$0xff]
  %v31 = vld [vmem:[%s0 + $0x80] sm:$0xff]
  %v32 = vld [vmem:[%s0 + $0x88] sm:$0xff]
  %v33 = vld [vmem:[%s0 + $0x90] sm:$0xff]
  %v34 = vld [vmem:[%s0 + $0x98] sm:$0xff]
  %v35 = vld [vmem:[%s0 + $0xa0] sm:$0xff]
  %v36 = vld [vmem:[%s0 + $0xa8] sm:$0xff]
  %v37 = vld [vmem:[%s0 + $0xb0] sm:$0xff]
  %v38 = vld [vmem:[%s0 + $0xb8] sm:$0xff]
  %v39 = vld [vmem:[%s0 + $0xc0] sm:$0xff]
  %v40 = vld [vmem:[%s1] sm:$0xf]
  %v41 = vld [vmem:[%s1 + $0x4] sm:$0xf]
  %v42 = vld [vmem:[%s1 + $0x8] sm:$0xf]
  %v43 = vld [vmem:[%s1 + $0xc] sm:$0xf]
  %v44 = vld [vmem:[%s1 + $0x10] sm:$0xf]
  %v45 = vld [vmem:[%s1 + $0x14] sm:$0xf]
  %v46 = vld [vmem:[%s1 + $0x18] sm:$0xf]
  %v47 = vld [vmem:[%s1 + $0x1c] sm:$0xf]
  %v48 = vld [vmem:[%s1 + $0x20] sm:$0xf]
  %v49 = vld [vmem:[%s1 + $0x24] sm:$0xf]
  %v50 = vld [vmem:[%s1 + $0x28] sm:$0xf]
  %v51 = vld [vmem:[%s1 + $0x2c] sm:$0xf]
  %v52 = vld [vmem:[%s1 + $0x30] sm:$0xf]
  %v53 = vld [vmem:[%s1 + $0x34] sm:$0xf]
  %v54 = vld [vmem:[%s1 + $0x38] sm:$0xf]
  %v55 = vld [vmem:[%s1 + $0x3c] sm:$0xf]
  %v56 = vld [vmem:[%s1 + $0x40] sm:$0xf]
  %v57 = vld [vmem:[%s1 + $0x44] sm:$0xf]
  %v58 = vld [vmem:[%s1 + $0x48] sm:$0x7]
  %v59 = vld [vmem:[%s2] sm:$0x1]
  %v61 = vlaneseq
  %v62 = vshrl.u32 %v61, 7
  %v63 = vsub.s32 0, %v62
  %v64 = vrot.slane %v59, %v63
  %v91 = vunpack.c.l.b16 %v15
  %v92 = vunpack.c.h.b16 %v15
  %v93 = vunpack.c.l.b16 %v16
  %v94 = vunpack.c.h.b16 %v16
  %v95 = vunpack.c.l.b16 %v17
  %v96 = vunpack.c.h.b16 %v17
  %v97 = vunpack.c.l.b16 %v18
  %v98 = vunpack.c.h.b16 %v18
  %v99 = vunpack.c.l.b16 %v19
  %v100 = vunpack.c.h.b16 %v19
  %v101 = vunpack.c.l.b16 %v20
  %v102 = vunpack.c.h.b16 %v20
  %v103 = vunpack.c.l.b16 %v21
  %v104 = vunpack.c.h.b16 %v21
  %v105 = vunpack.c.l.b16 %v22
  %v106 = vunpack.c.h.b16 %v22
  %v107 = vunpack.c.l.b16 %v23
  %v108 = vunpack.c.h.b16 %v23
  %v109 = vunpack.c.l.b16 %v24
  %v110 = vunpack.c.h.b16 %v24
  %v111 = vunpack.c.l.b16 %v25
  %v112 = vunpack.c.h.b16 %v25
  %v113 = vunpack.c.l.b16 %v26
  %v114 = vunpack.c.h.b16 %v26
  %v115 = vunpack.c.l.b16 %v27
  %v116 = vunpack.c.h.b16 %v27
  %v117 = vunpack.c.l.b16 %v28
  %v118 = vunpack.c.h.b16 %v28
  %v119 = vunpack.c.l.b16 %v29
  %v120 = vunpack.c.h.b16 %v29
  %v121 = vunpack.c.l.b16 %v30
  %v122 = vunpack.c.h.b16 %v30
  %v123 = vunpack.c.l.b16 %v31
  %v124 = vunpack.c.h.b16 %v31
  %v125 = vunpack.c.l.b16 %v32
  %v126 = vunpack.c.h.b16 %v32
  %v127 = vunpack.c.l.b16 %v33
  %v128 = vunpack.c.h.b16 %v33
  %v129 = vunpack.c.l.b16 %v34
  %v130 = vunpack.c.h.b16 %v34
  %v131 = vunpack.c.l.b16 %v35
  %v132 = vunpack.c.h.b16 %v35
  %v133 = vunpack.c.l.b16 %v36
  %v134 = vunpack.c.h.b16 %v36
  %v135 = vunpack.c.l.b16 %v37
  %v136 = vunpack.c.h.b16 %v37
  %v137 = vunpack.c.l.b16 %v38
  %v138 = vunpack.c.h.b16 %v38
  %v139 = vunpack.c.l.b16 %v39
  %v140 = vunpack.c.h.b16 %v39
  %v141 = vpack.c.b16 %v93, %v91
  %v142 = vpack.c.b16 %v94, %v92
  %v143 = vpack.c.b16 %v97, %v95
  %v144 = vpack.c.b16 %v98, %v96
  %v145 = vpack.c.b16 %v101, %v99
  %v146 = vpack.c.b16 %v102, %v100
  %v147 = vpack.c.b16 %v105, %v103
  %v148 = vpack.c.b16 %v106, %v104
  %v149 = vpack.c.b16 %v109, %v107
  %v150 = vpack.c.b16 %v110, %v108
  %v151 = vpack.c.b16 %v113, %v111
  %v152 = vpack.c.b16 %v114, %v112
  %v153 = vpack.c.b16 %v117, %v115
  %v154 = vpack.c.b16 %v118, %v116
  %v155 = vpack.c.b16 %v121, %v119
  %v156 = vpack.c.b16 %v122, %v120
  %v157 = vpack.c.b16 %v125, %v123
  %v158 = vpack.c.b16 %v126, %v124
  %v159 = vpack.c.b16 %v129, %v127
  %v160 = vpack.c.b16 %v130, %v128
  %v161 = vpack.c.b16 %v133, %v131
  %v162 = vpack.c.b16 %v134, %v132
  %v163 = vpack.c.b16 %v137, %v135
  %v164 = vpack.c.b16 %v138, %v136
  %v165 = vpack.c.b16 %v139, %v139
  %v166 = vpack.c.b16 %v140, %v140
  %v199 = vunpack.c.l.b16 %v40
  %v200 = vunpack.c.l.b16 %v41
  %v201 = vunpack.c.l.b16 %v42
  %v202 = vunpack.c.l.b16 %v43
  %v203 = vunpack.c.l.b16 %v44
  %v204 = vunpack.c.l.b16 %v45
  %v205 = vunpack.c.l.b16 %v46
  %v206 = vunpack.c.l.b16 %v47
  %v207 = vunpack.c.l.b16 %v48
  %v208 = vunpack.c.l.b16 %v49
  %v209 = vunpack.c.l.b16 %v50
  %v210 = vunpack.c.l.b16 %v51
  %v211 = vunpack.c.l.b16 %v52
  %v212 = vunpack.c.l.b16 %v53
  %v213 = vunpack.c.l.b16 %v54
  %v214 = vunpack.c.l.b16 %v55
  %v215 = vunpack.c.l.b16 %v56
  %v216 = vunpack.c.l.b16 %v57
  %v217 = vunpack.c.l.b16 %v58
  %v218 = vpack.c.b16 %v200, %v199
  %v219 = vpack.c.b16 %v202, %v201
  %v220 = vpack.c.b16 %v204, %v203
  %v221 = vpack.c.b16 %v206, %v205
  %v222 = vpack.c.b16 %v208, %v207
  %v223 = vpack.c.b16 %v210, %v209
  %v224 = vpack.c.b16 %v212, %v211
  %v225 = vpack.c.b16 %v214, %v213
  %v226 = vpack.c.b16 %v216, %v215
  %v227 = vpack.c.b16 %v217, %v217
  %vm237 = vcmask 179200
  %v239 = vsel %vm237, %v142, 0
  %v242 = vsel %vm237, %v144, 0
  %v245 = vsel %vm237, %v146, 0
  %v248 = vsel %vm237, %v148, 0
  %v251 = vsel %vm237, %v150, 0
  %v254 = vsel %vm237, %v152, 0
  %v257 = vsel %vm237, %v154, 0
  %v260 = vsel %vm237, %v156, 0
  %v263 = vsel %vm237, %v158, 0
  %v266 = vsel %vm237, %v160, 0
  %v269 = vsel %vm237, %v162, 0
  %v272 = vsel %vm237, %v164, 0
  %v275 = vsel %vm237, %v166, 0
  %vm277 = vcmask 1042432
  %v279 = vsel %vm277, %v227, 0
  %281 = vmatprep.subr.bf16.mxu0 0
  %282 = vmatpush1.bf16.msra.mxu0 %v218
  %283 = vmatprep.subr.bf16.mxu0 0
  %284 = vmatpush1.bf16.msra.mxu0 %v219
  %285 = vmatprep.subr.bf16.mxu0 0
  %286 = vmatpush1.bf16.msra.mxu0 %v220
  %287 = vmatprep.subr.bf16.mxu0 0
  %288 = vmatpush1.bf16.msra.mxu0 %v221
  %289 = vmatprep.subr.bf16.mxu0 0
  %290 = vmatpush1.bf16.msra.mxu0 %v222
  %291 = vmatprep.subr.bf16.mxu0 0
  %292 = vmatpush1.bf16.msra.mxu0 %v223
  %293 = vmatprep.subr.bf16.mxu0 0
  %294 = vmatpush1.bf16.msra.mxu0 %v224
  %295 = vmatprep.subr.bf16.mxu0 0
  %296 = vmatpush1.bf16.msra.mxu0 %v225
  %297 = vmatprep.subr.bf16.mxu0 0
  %298 = vmatpush1.bf16.msra.mxu0 %v226
  %299 = vmatprep.subr.bf16.mxu0 0
  %300 = vmatpush1.bf16.msra.mxu0 %v279
  %301 = vmatprep.subr.bf16.mxu0 0
  %302 = vmatpush1.bf16.msra.mxu0 0
  %303 = vmatprep.subr.bf16.mxu0 0
  %304 = vmatpush1.bf16.msra.mxu0 0
  %305 = vmatprep.subr.bf16.mxu0 0
  %306 = vmatpush1.bf16.msra.mxu0 0
  %307 = vmatprep.subr.bf16.mxu0 0
  %308 = vmatpush1.bf16.msra.mxu0 0
  %309 = vmatprep.subr.bf16.mxu0 0
  %310 = vmatpush1.bf16.msra.mxu0 0
  %311 = vmatprep.subr.bf16.mxu0 0
  %312 = vmatpush1.bf16.msra.mxu0 0
  %313 = vmatprep.mubr.bf16.mxu0 %v239
  %314 = vmatmul.mubr.bf16.gmra.mrb[0].mxu0 %v141
  %v315 = vpop.f32.mrb[0].mxu0
  %v316 = vadd.f32 %v64, %v315
  %v317 = vpop.f32.mrb[0].mxu0
  %v318 = vpop.f32.mrb[0].mxu0
  %v319 = vadd.f32 %v64, %v318
  %v320 = vpop.f32.mrb[0].mxu0
  %321 = vmatprep.mubr.bf16.mxu0 %v242
  %322 = vmatmul.mubr.bf16.gmra.mrb[0].mxu0 %v143
  %v323 = vpop.f32.mrb[0].mxu0
  %v324 = vadd.f32 %v64, %v323
  %v325 = vpop.f32.mrb[0].mxu0
  %v326 = vpop.f32.mrb[0].mxu0
  %v327 = vadd.f32 %v64, %v326
  %v328 = vpop.f32.mrb[0].mxu0
  %329 = vmatprep.mubr.bf16.mxu0 %v245
  %330 = vmatmul.mubr.bf16.gmra.mrb[0].mxu0 %v145
  %v331 = vpop.f32.mrb[0].mxu0
  %v332 = vadd.f32 %v64, %v331
  %v333 = vpop.f32.mrb[0].mxu0
  %v334 = vpop.f32.mrb[0].mxu0
  %v335 = vadd.f32 %v64, %v334
  %v336 = vpop.f32.mrb[0].mxu0
  %337 = vmatprep.mubr.bf16.mxu0 %v248
  %338 = vmatmul.mubr.bf16.gmra.mrb[0].mxu0 %v147
  %v339 = vpop.f32.mrb[0].mxu0
  %v340 = vadd.f32 %v64, %v339
  %v341 = vpop.f32.mrb[0].mxu0
  %v342 = vpop.f32.mrb[0].mxu0
  %v343 = vadd.f32 %v64, %v342
  %v344 = vpop.f32.mrb[0].mxu0
  %345 = vmatprep.mubr.bf16.mxu0 %v251
  %346 = vmatmul.mubr.bf16.gmra.mrb[0].mxu0 %v149
  %v347 = vpop.f32.mrb[0].mxu0
  %v348 = vadd.f32 %v64, %v347
  %v349 = vpop.f32.mrb[0].mxu0
  %v350 = vpop.f32.mrb[0].mxu0
  %v351 = vadd.f32 %v64, %v350
  %v352 = vpop.f32.mrb[0].mxu0
  %353 = vmatprep.mubr.bf16.mxu0 %v254
  %354 = vmatmul.mubr.bf16.gmra.mrb[0].mxu0 %v151
  %v355 = vpop.f32.mrb[0].mxu0
  %v356 = vadd.f32 %v64, %v355
  %v357 = vpop.f32.mrb[0].mxu0
  %v358 = vpop.f32.mrb[0].mxu0
  %v359 = vadd.f32 %v64, %v358
  %v360 = vpop.f32.mrb[0].mxu0
  %361 = vmatprep.mubr.bf16.mxu0 %v257
  %362 = vmatmul.mubr.bf16.gmra.mrb[0].mxu0 %v153
  %v363 = vpop.f32.mrb[0].mxu0
  %v364 = vadd.f32 %v64, %v363
  %v365 = vpop.f32.mrb[0].mxu0
  %v366 = vpop.f32.mrb[0].mxu0
  %v367 = vadd.f32 %v64, %v366
  %v368 = vpop.f32.mrb[0].mxu0
  %369 = vmatprep.mubr.bf16.mxu0 %v260
  %370 = vmatmul.mubr.bf16.gmra.mrb[0].mxu0 %v155
  %v371 = vpop.f32.mrb[0].mxu0
  %v372 = vadd.f32 %v64, %v371
  %v373 = vpop.f32.mrb[0].mxu0
  %v374 = vpop.f32.mrb[0].mxu0
  %v375 = vadd.f32 %v64, %v374
  %v376 = vpop.f32.mrb[0].mxu0
  %377 = vmatprep.mubr.bf16.mxu0 %v263
  %378 = vmatmul.mubr.bf16.gmra.mrb[0].mxu0 %v157
  %v379 = vpop.f32.mrb[0].mxu0
  %v380 = vadd.f32 %v64, %v379
  %v381 = vpop.f32.mrb[0].mxu0
  %v382 = vpop.f32.mrb[0].mxu0
  %v383 = vadd.f32 %v64, %v382
  %v384 = vpop.f32.mrb[0].mxu0
  %385 = vmatprep.mubr.bf16.mxu0 %v266
  %386 = vmatmul.mubr.bf16.gmra.mrb[0].mxu0 %v159
  %v387 = vpop.f32.mrb[0].mxu0
  %v388 = vadd.f32 %v64, %v387
  %v389 = vpop.f32.mrb[0].mxu0
  %v390 = vpop.f32.mrb[0].mxu0
  %v391 = vadd.f32 %v64, %v390
  %v392 = vpop.f32.mrb[0].mxu0
  %393 = vmatprep.mubr.bf16.mxu0 %v269
  %394 = vmatmul.mubr.bf16.gmra.mrb[0].mxu0 %v161
  %v395 = vpop.f32.mrb[0].mxu0
  %v396 = vadd.f32 %v64, %v395
  %v397 = vpop.f32.mrb[0].mxu0
  %v398 = vpop.f32.mrb[0].mxu0
  %v399 = vadd.f32 %v64, %v398
  %v400 = vpop.f32.mrb[0].mxu0
  %401 = vmatprep.mubr.bf16.mxu0 %v272
  %402 = vmatmul.mubr.bf16.gmra.mrb[0].mxu0 %v163
  %v403 = vpop.f32.mrb[0].mxu0
  %v404 = vadd.f32 %v64, %v403
  %v405 = vpop.f32.mrb[0].mxu0
  %v406 = vpop.f32.mrb[0].mxu0
  %v407 = vadd.f32 %v64, %v406
  %v408 = vpop.f32.mrb[0].mxu0
  %409 = vmatprep.mubr.bf16.mxu0 %v275
  %410 = vmatmul.mubr.bf16.gmra.mrb[0].mxu0 %v165
  %v411 = vpop.f32.mrb[0].mxu0
  %v412 = vadd.f32 %v64, %v411
  %v413 = vpop.f32.mrb[0].mxu0
  %v414 = vpop.f32.mrb[0].mxu0
  %v415 = vpop.f32.mrb[0].mxu0
  %416 = vdwg.mxu0
  %v417 = vtanh.pop %v316
  %v418 = vtanh.pop %v319
  %v419 = vtanh.pop %v324
  %v420 = vtanh.pop %v327
  %v421 = vtanh.pop %v332
  %v422 = vtanh.pop %v335
  %v423 = vtanh.pop %v340
  %v424 = vtanh.pop %v343
  %v425 = vtanh.pop %v348
  %v426 = vtanh.pop %v351
  %v427 = vtanh.pop %v356
  %v428 = vtanh.pop %v359
  %v429 = vtanh.pop %v364
  %v430 = vtanh.pop %v367
  %v431 = vtanh.pop %v372
  %v432 = vtanh.pop %v375
  %v433 = vtanh.pop %v380
  %v434 = vtanh.pop %v383
  %v435 = vtanh.pop %v388
  %v436 = vtanh.pop %v391
  %v437 = vtanh.pop %v396
  %v438 = vtanh.pop %v399
  %v439 = vtanh.pop %v404
  %v440 = vtanh.pop %v407
  %v441 = vtanh.pop %v412
  %v442 = vpack.c.bf16 %v418, %v417
  %v443 = vpack.c.bf16 %v420, %v419
  %v444 = vpack.c.bf16 %v422, %v421
  %v445 = vpack.c.bf16 %v424, %v423
  %v446 = vpack.c.bf16 %v426, %v425
  %v447 = vpack.c.bf16 %v428, %v427
  %v448 = vpack.c.bf16 %v430, %v429
  %v449 = vpack.c.bf16 %v432, %v431
  %v450 = vpack.c.bf16 %v434, %v433
  %v451 = vpack.c.bf16 %v436, %v435
  %v452 = vpack.c.bf16 %v438, %v437
  %v453 = vpack.c.bf16 %v440, %v439
  %v454 = vpack.c.bf16 %v441, %v441
  %v468 = vunpack.c.l.b16 %v442
  %v469 = vunpack.c.h.b16 %v442
  %v470 = vunpack.c.l.b16 %v443
  %v471 = vunpack.c.h.b16 %v443
  %v472 = vunpack.c.l.b16 %v444
  %v473 = vunpack.c.h.b16 %v444
  %v474 = vunpack.c.l.b16 %v445
  %v475 = vunpack.c.h.b16 %v445
  %v476 = vunpack.c.l.b16 %v446
  %v477 = vunpack.c.h.b16 %v446
  %v478 = vunpack.c.l.b16 %v447
  %v479 = vunpack.c.h.b16 %v447
  %v480 = vunpack.c.l.b16 %v448
  %v481 = vunpack.c.h.b16 %v448
  %v482 = vunpack.c.l.b16 %v449
  %v483 = vunpack.c.h.b16 %v449
  %v484 = vunpack.c.l.b16 %v450
  %v485 = vunpack.c.h.b16 %v450
  %v486 = vunpack.c.l.b16 %v451
  %v487 = vunpack.c.h.b16 %v451
  %v488 = vunpack.c.l.b16 %v452
  %v489 = vunpack.c.h.b16 %v452
  %v490 = vunpack.c.l.b16 %v453
  %v491 = vunpack.c.h.b16 %v453
  %v492 = vunpack.c.l.b16 %v454
  %v493 = vpack.c.b16 %v468, %v468
  %v494 = vpack.c.b16 %v469, %v469
  %v495 = vpack.c.b16 %v470, %v470
  %v496 = vpack.c.b16 %v471, %v471
  %v497 = vpack.c.b16 %v472, %v472
  %v498 = vpack.c.b16 %v473, %v473
  %v499 = vpack.c.b16 %v474, %v474
  %v500 = vpack.c.b16 %v475, %v475
  %v501 = vpack.c.b16 %v476, %v476
  %v502 = vpack.c.b16 %v477, %v477
  %v503 = vpack.c.b16 %v478, %v478
  %v504 = vpack.c.b16 %v479, %v479
  %v505 = vpack.c.b16 %v480, %v480
  %v506 = vpack.c.b16 %v481, %v481
  %v507 = vpack.c.b16 %v482, %v482
  %v508 = vpack.c.b16 %v483, %v483
  %v509 = vpack.c.b16 %v484, %v484
  %v510 = vpack.c.b16 %v485, %v485
  %v511 = vpack.c.b16 %v486, %v486
  %v512 = vpack.c.b16 %v487, %v487
  %v513 = vpack.c.b16 %v488, %v488
  %v514 = vpack.c.b16 %v489, %v489
  %v515 = vpack.c.b16 %v490, %v490
  %v516 = vpack.c.b16 %v491, %v491
  %v517 = vpack.c.b16 %v492, %v492
  %543 = vst [vmem:[%s3] sm:$0xf] %v493
  %544 = vst [vmem:[%s3 + $0x4] sm:$0xf] %v494
  %545 = vst [vmem:[%s3 + $0x8] sm:$0xf] %v495
  %546 = vst [vmem:[%s3 + $0xc] sm:$0xf] %v496
  %547 = vst [vmem:[%s3 + $0x10] sm:$0xf] %v497
  %548 = vst [vmem:[%s3 + $0x14] sm:$0xf] %v498
  %549 = vst [vmem:[%s3 + $0x18] sm:$0xf] %v499
  %550 = vst [vmem:[%s3 + $0x1c] sm:$0xf] %v500
  %551 = vst [vmem:[%s3 + $0x20] sm:$0xf] %v501
  %552 = vst [vmem:[%s3 + $0x24] sm:$0xf] %v502
  %553 = vst [vmem:[%s3 + $0x28] sm:$0xf] %v503
  %554 = vst [vmem:[%s3 + $0x2c] sm:$0xf] %v504
  %555 = vst [vmem:[%s3 + $0x30] sm:$0xf] %v505
  %556 = vst [vmem:[%s3 + $0x34] sm:$0xf] %v506
  %557 = vst [vmem:[%s3 + $0x38] sm:$0xf] %v507
  %558 = vst [vmem:[%s3 + $0x3c] sm:$0xf] %v508
  %559 = vst [vmem:[%s3 + $0x40] sm:$0xf] %v509
  %560 = vst [vmem:[%s3 + $0x44] sm:$0xf] %v510
  %561 = vst [vmem:[%s3 + $0x48] sm:$0xf] %v511
  %562 = vst [vmem:[%s3 + $0x4c] sm:$0xf] %v512
  %563 = vst [vmem:[%s3 + $0x50] sm:$0xf] %v513
  %564 = vst [vmem:[%s3 + $0x54] sm:$0xf] %v514
  %565 = vst [vmem:[%s3 + $0x58] sm:$0xf] %v515
  %566 = vst [vmem:[%s3 + $0x5c] sm:$0xf] %v516
  %567 = vst [vmem:[%s3 + $0x60] sm:$0xf] %v517
  // Predicated region
  $region14: #{lenet_forward.4} parent=0 // pred_check
    _
  $region15: #{lenet_forward.4} parent=0 // pred_check_branch
    %569 = sbr.rel (0) target = $region17
  $region16: #{lenet_forward.4} parent=0 // pred_region
    _
  $region17: #{lenet_forward.4} parent=0 // pred_fallthru
    _
  // Predicated region
  $region18: #{lenet_forward.4} parent=0 // pred_check
    _
  $region19: #{lenet_forward.4} parent=0 // pred_check_branch
    %571 = sbr.rel (0) target = $region21
  $region20: #{lenet_forward.4} parent=0 // pred_region
    _
  $region21: #{lenet_forward.4} parent=0 // pred_fallthru
    _

// kernel: lenet_forward.5
$region0: #{lenet_forward.5}
  #allocation0 [shape = 'u32[]', space=smem, size = 0x4, offset = 0x4, fixed_abs, tag = 'smem constant byte address 0x4 - core index']
  #allocation1 [shape = 'u32[144,128]{1,0:T(1,128)}', space=vmem, size = 0x12000, scoped, tag = 'internal scratch']
  %s0 = inlined_call_operand.vmem [shape: bf16[2,400], index: 0, kind: input, shape index: {}]
  %s1 = inlined_call_operand.vmem [shape: bf16[400,128], index: 1, kind: input, shape index: {}]
  %s2 = inlined_call_operand.vmem [shape: f32[1,128], index: 2, kind: input, shape index: {}]
  %s3 = inlined_call_operand.vmem [shape: bf16[128,128], index: 3, kind: input, shape index: {}]
  %s4 = inlined_call_operand.vmem [shape: f32[1,128], index: 4, kind: input, shape index: {}]
  %s5 = inlined_call_operand.vmem [shape: bf16[128,128], index: 5, kind: input, shape index: {}]
  %s6 = inlined_call_operand.vmem [shape: f32[1,128], index: 6, kind: input, shape index: {}]
  %s7 = inlined_call_operand.hbm [shape: f32[2,128], index: 7, kind: output, shape index: {}]
  %s8 = sld [smem:[#allocation0]]
  $region38: #{lenet_forward.5} parent=0
    _
  %s10 = ssub.s32 1, %s8
  %s11 = scalar_select 0, %s10, %s8
  $region1: #{lenet_forward.5} parent=0
    #allocation2 [shape = 'u8[1024]{0}', space=vmem, size = 0x400, scoped, tag = 'output window, operand 0, single buffered']
    #allocation3 [shape = 's32[1]{0}', space=sflag, size = 0x4, scoped, tag = 'scoped memory for lenet_forward.5']
    %12 = vsyncpa [#allocation3], 0
    // Predicated region
    $region2: #{lenet_forward.5} parent=1 // pred_check
      _
    $region3: #{lenet_forward.5} parent=1 // pred_check_branch
      %14 = sbr.rel (0) target = $region5
    $region4: #{lenet_forward.5} parent=1 // pred_region
      _
    $region5: #{lenet_forward.5} parent=1 // pred_fallthru
      _
    // Predicated region
    $region6: #{lenet_forward.5} parent=1 // pred_check
      _
    $region7: #{lenet_forward.5} parent=1 // pred_check_branch
      %16 = sbr.rel (0) target = $region9
    $region8: #{lenet_forward.5} parent=1 // pred_region
      _
    $region9: #{lenet_forward.5} parent=1 // pred_fallthru
      _
    // Predicated region
    $region10: #{lenet_forward.5} parent=1 // pred_check
      _
    $region11: #{lenet_forward.5} parent=1 // pred_check_branch
      %18 = sbr.rel (0) target = $region13
    $region12: #{lenet_forward.5} parent=1 // pred_region
      _
    $region13: #{lenet_forward.5} parent=1 // pred_fallthru
      _
    // Predicated region
    $region14: #{lenet_forward.5} parent=1 // pred_check
      _
    $region15: #{lenet_forward.5} parent=1 // pred_check_branch
      %20 = sbr.rel (0) target = $region17
    $region16: #{lenet_forward.5} parent=1 // pred_region
      _
    $region17: #{lenet_forward.5} parent=1 // pred_fallthru
      _
    // Predicated region
    $region18: #{lenet_forward.5} parent=1 // pred_check
      _
    $region19: #{lenet_forward.5} parent=1 // pred_check_branch
      %22 = sbr.rel (0) target = $region21
    $region20: #{lenet_forward.5} parent=1 // pred_region
      _
    $region21: #{lenet_forward.5} parent=1 // pred_fallthru
      _
    // Predicated region
    $region22: #{lenet_forward.5} parent=1 // pred_check
      _
    $region23: #{lenet_forward.5} parent=1 // pred_check_branch
      %24 = sbr.rel (0) target = $region25
    $region24: #{lenet_forward.5} parent=1 // pred_region
      _
    $region25: #{lenet_forward.5} parent=1 // pred_fallthru
      _
    // Predicated region
    $region26: #{lenet_forward.5} parent=1 // pred_check
      _
    $region27: #{lenet_forward.5} parent=1 // pred_check_branch
      %26 = sbr.rel (0) target = $region29
    $region28: #{lenet_forward.5} parent=1 // pred_region
      _
    $region29: #{lenet_forward.5} parent=1 // pred_fallthru
      _
    %v28 = vld [vmem:[%s0] sm:$0xf]
    %v29 = vld [vmem:[%s1] sm:$0xf]
    %v30 = vld [vmem:[%s1 + $0x4] sm:$0xf]
    %v31 = vld [vmem:[%s1 + $0x8] sm:$0xf]
    %v32 = vld [vmem:[%s1 + $0xc] sm:$0xf]
    %v33 = vld [vmem:[%s1 + $0x10] sm:$0xf]
    %v34 = vld [vmem:[%s1 + $0x14] sm:$0xf]
    %v35 = vld [vmem:[%s1 + $0x18] sm:$0xf]
    %v36 = vld [vmem:[%s1 + $0x1c] sm:$0xf]
    %v37 = vld [vmem:[%s1 + $0x20] sm:$0xf]
    %v38 = vld [vmem:[%s1 + $0x24] sm:$0xf]
    %v39 = vld [vmem:[%s1 + $0x28] sm:$0xf]
    %v40 = vld [vmem:[%s1 + $0x2c] sm:$0xf]
    %v41 = vld [vmem:[%s1 + $0x30] sm:$0xf]
    %v42 = vld [vmem:[%s1 + $0x34] sm:$0xf]
    %v43 = vld [vmem:[%s1 + $0x38] sm:$0xf]
    %v44 = vld [vmem:[%s1 + $0x3c] sm:$0xf]
    %v45 = vld [vmem:[%s1 + $0x40] sm:$0xf]
    %v46 = vld [vmem:[%s1 + $0x44] sm:$0xf]
    %v47 = vld [vmem:[%s1 + $0x48] sm:$0xf]
    %v48 = vld [vmem:[%s1 + $0x4c] sm:$0xf]
    %v49 = vld [vmem:[%s1 + $0x50] sm:$0xf]
    %v50 = vld [vmem:[%s1 + $0x54] sm:$0xf]
    %v51 = vld [vmem:[%s1 + $0x58] sm:$0xf]
    %v52 = vld [vmem:[%s1 + $0x5c] sm:$0xf]
    %v53 = vld [vmem:[%s1 + $0x60] sm:$0xf]
    %v54 = vld [vmem:[%s1 + $0x64] sm:$0xf]
    %v55 = vld [vmem:[%s1 + $0x68] sm:$0xf]
    %v56 = vld [vmem:[%s1 + $0x6c] sm:$0xf]
    %v57 = vld [vmem:[%s1 + $0x70] sm:$0xf]
    %v58 = vld [vmem:[%s1 + $0x74] sm:$0xf]
    %v59 = vld [vmem:[%s1 + $0x78] sm:$0xf]
    %v60 = vld [vmem:[%s1 + $0x7c] sm:$0xf]
    %v61 = vld [vmem:[%s1 + $0x80] sm:$0xf]
    %v62 = vld [vmem:[%s1 + $0x84] sm:$0xf]
    %v63 = vld [vmem:[%s1 + $0x88] sm:$0xf]
    %v64 = vld [vmem:[%s1 + $0x8c] sm:$0xf]
    %v65 = vld [vmem:[%s1 + $0x90] sm:$0xf]
    %v66 = vld [vmem:[%s1 + $0x94] sm:$0xf]
    %v67 = vld [vmem:[%s1 + $0x98] sm:$0xf]
    %v68 = vld [vmem:[%s1 + $0x9c] sm:$0xf]
    %v69 = vld [vmem:[%s1 + $0xa0] sm:$0xf]
    %v70 = vld [vmem:[%s1 + $0xa4] sm:$0xf]
    %v71 = vld [vmem:[%s1 + $0xa8] sm:$0xf]
    %v72 = vld [vmem:[%s1 + $0xac] sm:$0xf]
    %v73 = vld [vmem:[%s1 + $0xb0] sm:$0xf]
    %v74 = vld [vmem:[%s1 + $0xb4] sm:$0xf]
    %v75 = vld [vmem:[%s1 + $0xb8] sm:$0xf]
    %v76 = vld [vmem:[%s1 + $0xbc] sm:$0xf]
    %v77 = vld [vmem:[%s1 + $0xc0] sm:$0xf]
    %v78 = vld [vmem:[%s1 + $0xc4] sm:$0xf]
    %v79 = vld [vmem:[%s2] sm:$0x1]
    %v81 = vlaneseq
    %v82 = vshrl.u32 %v81, 7
    %v83 = vsub.s32 0, %v82
    %v84 = vrot.slane %v79, %v83
    %v88 = vunpack.c.l.s4 1966171168
    %v89 = vunpack.c.0.s8 %v88
    %v90 = vlaneseq
    %v91 = vshrl.u32 %v90, 7
    %v92 = vsub.s32 %v89, %v91
    %v93 = vrot.slane %v28, %v92
    %v94 = vcombine.high %v93, %v93
    %v96 = vunpack.c.l.s4 1966171168
    %v97 = vunpack.c.0.s8 %v96
    %v98 = vlaneseq
    %v99 = vshrl.u32 %v98, 7
    %v100 = vsub.s32 %v97, %v99
    %v101 = vrot.slane %v93, %v100
    %v103 = vunpack.c.l.s4 1966171168
    %v104 = vunpack.c.0.s8 %v103
    %v105 = vlaneseq
    %v106 = vshrl.u32 %v105, 7
    %v107 = vsub.s32 %v104, %v106
    %v108 = vrot.slane %v94, %v107
    %v109 = vcombine.high %v101, %v101
    %v110 = vcombine.high %v108, %v108
    %v164 = vunpack.c.l.b16 %v29
    %v165 = vunpack.c.l.b16 %v30
    %v166 = vunpack.c.l.b16 %v31
    %v167 = vunpack.c.l.b16 %v32
    %v168 = vunpack.c.l.b16 %v33
    %v169 = vunpack.c.l.b16 %v34
    %v170 = vunpack.c.l.b16 %v35
    %v171 = vunpack.c.l.b16 %v36
    %v172 = vunpack.c.l.b16 %v37
    %v173 = vunpack.c.l.b16 %v38
    %v174 = vunpack.c.l.b16 %v39
    %v175 = vunpack.c.l.b16 %v40
    %v176 = vunpack.c.l.b16 %v41
    %v177 = vunpack.c.l.b16 %v42
    %v178 = vunpack.c.l.b16 %v43
    %v179 = vunpack.c.l.b16 %v44
    %v180 = vunpack.c.l.b16 %v45
    %v181 = vunpack.c.l.b16 %v46
    %v182 = vunpack.c.l.b16 %v47
    %v183 = vunpack.c.l.b16 %v48
    %v184 = vunpack.c.l.b16 %v49
    %v185 = vunpack.c.l.b16 %v50
    %v186 = vunpack.c.l.b16 %v51
    %v187 = vunpack.c.l.b16 %v52
    %v188 = vunpack.c.l.b16 %v53
    %v189 = vunpack.c.l.b16 %v54
    %v190 = vunpack.c.l.b16 %v55
    %v191 = vunpack.c.l.b16 %v56
    %v192 = vunpack.c.l.b16 %v57
    %v193 = vunpack.c.l.b16 %v58
    %v194 = vunpack.c.l.b16 %v59
    %v195 = vunpack.c.l.b16 %v60
    %v196 = vunpack.c.l.b16 %v61
    %v197 = vunpack.c.l.b16 %v62
    %v198 = vunpack.c.l.b16 %v63
    %v199 = vunpack.c.l.b16 %v64
    %v200 = vunpack.c.l.b16 %v65
    %v201 = vunpack.c.l.b16 %v66
    %v202 = vunpack.c.l.b16 %v67
    %v203 = vunpack.c.l.b16 %v68
    %v204 = vunpack.c.l.b16 %v69
    %v205 = vunpack.c.l.b16 %v70
    %v206 = vunpack.c.l.b16 %v71
    %v207 = vunpack.c.l.b16 %v72
    %v208 = vunpack.c.l.b16 %v73
    %v209 = vunpack.c.l.b16 %v74
    %v210 = vunpack.c.l.b16 %v75
    %v211 = vunpack.c.l.b16 %v76
    %v212 = vunpack.c.l.b16 %v77
    %v213 = vunpack.c.l.b16 %v78
    %v214 = vpack.c.b16 %v165, %v164
    %v215 = vpack.c.b16 %v167, %v166
    %v216 = vpack.c.b16 %v169, %v168
    %v217 = vpack.c.b16 %v171, %v170
    %v218 = vpack.c.b16 %v173, %v172
    %v219 = vpack.c.b16 %v175, %v174
    %v220 = vpack.c.b16 %v177, %v176
    %v221 = vpack.c.b16 %v179, %v178
    %v222 = vpack.c.b16 %v181, %v180
    %v223 = vpack.c.b16 %v183, %v182
    %v224 = vpack.c.b16 %v185, %v184
    %v225 = vpack.c.b16 %v187, %v186
    %v226 = vpack.c.b16 %v189, %v188
    %v227 = vpack.c.b16 %v191, %v190
    %v228 = vpack.c.b16 %v193, %v192
    %v229 = vpack.c.b16 %v195, %v194
    %v230 = vpack.c.b16 %v197, %v196
    %v231 = vpack.c.b16 %v199, %v198
    %v232 = vpack.c.b16 %v201, %v200
    %v233 = vpack.c.b16 %v203, %v202
    %v234 = vpack.c.b16 %v205, %v204
    %v235 = vpack.c.b16 %v207, %v206
    %v236 = vpack.c.b16 %v209, %v208
    %v237 = vpack.c.b16 %v211, %v210
    %v238 = vpack.c.b16 %v213, %v212
    %vm264 = vcmask 130048
    %v266 = vsel %vm264, %v110, 0
    %268 = vmatprep.subr.bf16.mxu0 0
    %269 = vmatpush1.bf16.msra.mxu0 %v214
    %270 = vmatprep.subr.bf16.mxu0 0
    %271 = vmatpush1.bf16.msra.mxu0 %v215
    %272 = vmatprep.subr.bf16.mxu0 0
    %273 = vmatpush1.bf16.msra.mxu0 %v216
    %274 = vmatprep.subr.bf16.mxu0 0
    %275 = vmatpush1.bf16.msra.mxu0 %v217
    %276 = vmatprep.subr.bf16.mxu0 0
    %277 = vmatpush1.bf16.msra.mxu0 %v218
    %278 = vmatprep.subr.bf16.mxu0 0
    %279 = vmatpush1.bf16.msra.mxu0 %v219
    %280 = vmatprep.subr.bf16.mxu0 0
    %281 = vmatpush1.bf16.msra.mxu0 %v220
    %282 = vmatprep.subr.bf16.mxu0 0
    %283 = vmatpush1.bf16.msra.mxu0 %v221
    %284 = vmatprep.subr.bf16.mxu0 0
    %285 = vmatpush1.bf16.msra.mxu0 %v222
    %286 = vmatprep.subr.bf16.mxu0 0
    %287 = vmatpush1.bf16.msra.mxu0 %v223
    %288 = vmatprep.subr.bf16.mxu0 0
    %289 = vmatpush1.bf16.msra.mxu0 %v224
    %290 = vmatprep.subr.bf16.mxu0 0
    %291 = vmatpush1.bf16.msra.mxu0 %v225
    %292 = vmatprep.subr.bf16.mxu0 0
    %293 = vmatpush1.bf16.msra.mxu0 %v226
    %294 = vmatprep.subr.bf16.mxu0 0
    %295 = vmatpush1.bf16.msra.mxu0 %v227
    %296 = vmatprep.subr.bf16.mxu0 0
    %297 = vmatpush1.bf16.msra.mxu0 %v228
    %298 = vmatprep.subr.bf16.mxu0 0
    %299 = vmatpush1.bf16.msra.mxu0 %v229
    %300 = vmatprep.mubr.bf16.mxu0 %v108
    %301 = vmatmul.mubr.bf16.gmra.mrb[0].mxu0 %v101
    %v302 = vpop.f32.mrb[0].mxu0
    %v303 = vadd.f32 %v84, %v302
    %v304 = vpop.f32.mrb[0].mxu0
    %v305 = vpop.f32.mrb[0].mxu0
    %v306 = vpop.f32.mrb[0].mxu0
    %307 = vdwg.mxu0
    %308 = vmatprep.subr.bf16.mxu0 0
    %309 = vmatpush1.bf16.msra.mxu0 %v230
    %310 = vmatprep.subr.bf16.mxu0 0
    %311 = vmatpush1.bf16.msra.mxu0 %v231
    %312 = vmatprep.subr.bf16.mxu0 0
    %313 = vmatpush1.bf16.msra.mxu0 %v232
    %314 = vmatprep.subr.bf16.mxu0 0
    %315 = vmatpush1.bf16.msra.mxu0 %v233
    %316 = vmatprep.subr.bf16.mxu0 0
    %317 = vmatpush1.bf16.msra.mxu0 %v234
    %318 = vmatprep.subr.bf16.mxu0 0
    %319 = vmatpush1.bf16.msra.mxu0 %v235
    %320 = vmatprep.subr.bf16.mxu0 0
    %321 = vmatpush1.bf16.msra.mxu0 %v236
    %322 = vmatprep.subr.bf16.mxu0 0
    %323 = vmatpush1.bf16.msra.mxu0 %v237
    %324 = vmatprep.subr.bf16.mxu0 0
    %325 = vmatpush1.bf16.msra.mxu0 %v238
    %326 = vmatprep.subr.bf16.mxu0 0
    %327 = vmatpush1.bf16.msra.mxu0 0
    %328 = vmatprep.subr.bf16.mxu0 0
    %329 = vmatpush1.bf16.msra.mxu0 0
    %330 = vmatprep.subr.bf16.mxu0 0
    %331 = vmatpush1.bf16.msra.mxu0 0
    %332 = vmatprep.subr.bf16.mxu0 0
    %333 = vmatpush1.bf16.msra.mxu0 0
    %334 = vmatprep.subr.bf16.mxu0 0
    %335 = vmatpush1.bf16.msra.mxu0 0
    %336 = vmatprep.subr.bf16.mxu0 0
    %337 = vmatpush1.bf16.msra.mxu0 0
    %338 = vmatprep.subr.bf16.mxu0 0
    %339 = vmatpush1.bf16.msra.mxu0 0
    %340 = vmatprep.mubr.bf16.mxu0 %v266
    %341 = vmatmul.mubr.bf16.gmra.mrb[0].mxu0 %v109
    %v342 = vpop.f32.mrb[0].mxu0
    %v343 = vadd.f32 %v303, %v342
    %v344 = vpop.f32.mrb[0].mxu0
    %v345 = vpop.f32.mrb[0].mxu0
    %v346 = vpop.f32.mrb[0].mxu0
    %347 = vdwg.mxu0
    %v348 = vtanh.pop %v343
    %v349 = vpack.c.bf16 %v348, %v348
    %v350 = vld [vmem:[%s3] sm:$0xf]
    %v351 = vld [vmem:[%s3 + $0x4] sm:$0xf]
    %v352 = vld [vmem:[%s3 + $0x8] sm:$0xf]
    %v353 = vld [vmem:[%s3 + $0xc] sm:$0xf]
    %v354 = vld [vmem:[%s3 + $0x10] sm:$0xf]
    %v355 = vld [vmem:[%s3 + $0x14] sm:$0xf]
    %v356 = vld [vmem:[%s3 + $0x18] sm:$0xf]
    %v357 = vld [vmem:[%s3 + $0x1c] sm:$0xf]
    %v358 = vld [vmem:[%s3 + $0x20] sm:$0xf]
    %v359 = vld [vmem:[%s3 + $0x24] sm:$0xf]
    %v360 = vld [vmem:[%s3 + $0x28] sm:$0xf]
    %v361 = vld [vmem:[%s3 + $0x2c] sm:$0xf]
    %v362 = vld [vmem:[%s3 + $0x30] sm:$0xf]
    %v363 = vld [vmem:[%s3 + $0x34] sm:$0xf]
    %v364 = vld [vmem:[%s3 + $0x38] sm:$0xf]
    %v365 = vld [vmem:[%s3 + $0x3c] sm:$0xf]
    %v366 = vld [vmem:[%s4] sm:$0x1]
    %v368 = vlaneseq
    %v369 = vshrl.u32 %v368, 7
    %v370 = vsub.s32 0, %v369
    %v371 = vrot.slane %v366, %v370
    %v389 = vunpack.c.l.b16 %v350
    %v390 = vunpack.c.l.b16 %v351
    %v391 = vunpack.c.l.b16 %v352
    %v392 = vunpack.c.l.b16 %v353
    %v393 = vunpack.c.l.b16 %v354
    %v394 = vunpack.c.l.b16 %v355
    %v395 = vunpack.c.l.b16 %v356
    %v396 = vunpack.c.l.b16 %v357
    %v397 = vunpack.c.l.b16 %v358
    %v398 = vunpack.c.l.b16 %v359
    %v399 = vunpack.c.l.b16 %v360
    %v400 = vunpack.c.l.b16 %v361
    %v401 = vunpack.c.l.b16 %v362
    %v402 = vunpack.c.l.b16 %v363
    %v403 = vunpack.c.l.b16 %v364
    %v404 = vunpack.c.l.b16 %v365
    %v405 = vpack.c.b16 %v390, %v389
    %v406 = vpack.c.b16 %v392, %v391
    %v407 = vpack.c.b16 %v394, %v393
    %v408 = vpack.c.b16 %v396, %v395
    %v409 = vpack.c.b16 %v398, %v397
    %v410 = vpack.c.b16 %v400, %v399
    %v411 = vpack.c.b16 %v402, %v401
    %v412 = vpack.c.b16 %v404, %v403
    %421 = vmatprep.subr.bf16.mxu0 0
    %422 = vmatpush1.bf16.msra.mxu0 %v405
    %423 = vmatprep.subr.bf16.mxu0 0
    %424 = vmatpush1.bf16.msra.mxu0 %v406
    %425 = vmatprep.subr.bf16.mxu0 0
    %426 = vmatpush1.bf16.msra.mxu0 %v407
    %427 = vmatprep.subr.bf16.mxu0 0
    %428 = vmatpush1.bf16.msra.mxu0 %v408
    %429 = vmatprep.subr.bf16.mxu0 0
    %430 = vmatpush1.bf16.msra.mxu0 %v409
    %431 = vmatprep.subr.bf16.mxu0 0
    %432 = vmatpush1.bf16.msra.mxu0 %v410
    %433 = vmatprep.subr.bf16.mxu0 0
    %434 = vmatpush1.bf16.msra.mxu0 %v411
    %435 = vmatprep.subr.bf16.mxu0 0
    %436 = vmatpush1.bf16.msra.mxu0 %v412
    %437 = vmatprep.subr.bf16.mxu0 0
    %438 = vmatpush1.bf16.msra.mxu0 0
    %439 = vmatprep.subr.bf16.mxu0 0
    %440 = vmatpush1.bf16.msra.mxu0 0
    %441 = vmatprep.subr.bf16.mxu0 0
    %442 = vmatpush1.bf16.msra.mxu0 0
    %443 = vmatprep.subr.bf16.mxu0 0
    %444 = vmatpush1.bf16.msra.mxu0 0
    %445 = vmatprep.subr.bf16.mxu0 0
    %446 = vmatpush1.bf16.msra.mxu0 0
    %447 = vmatprep.subr.bf16.mxu0 0
    %448 = vmatpush1.bf16.msra.mxu0 0
    %449 = vmatprep.subr.bf16.mxu0 0
    %450 = vmatpush1.bf16.msra.mxu0 0
    %451 = vmatprep.subr.bf16.mxu0 0
    %452 = vmatpush1.bf16.msra.mxu0 0
    %453 = vmatprep.mubr.bf16.mxu0 0
    %454 = vmatmul.mubr.bf16.gmra.mrb[0].mxu0 %v349
    %v455 = vpop.f32.mrb[0].mxu0
    %v456 = vadd.f32 %v371, %v455
    %v457 = vpop.f32.mrb[0].mxu0
    %v458 = vpop.f32.mrb[0].mxu0
    %v459 = vpop.f32.mrb[0].mxu0
    %460 = vdwg.mxu0
    %v461 = vtanh.pop %v456
    %v462 = vpack.c.bf16 %v461, %v461
    %v463 = vld [vmem:[%s5] sm:$0xf]
    %v464 = vld [vmem:[%s5 + $0x4] sm:$0xf]
    %v465 = vld [vmem:[%s5 + $0x8] sm:$0xf]
    %v466 = vld [vmem:[%s5 + $0xc] sm:$0xf]
    %v467 = vld [vmem:[%s5 + $0x10] sm:$0xf]
    %v468 = vld [vmem:[%s5 + $0x14] sm:$0xf]
    %v469 = vld [vmem:[%s5 + $0x18] sm:$0xf]
    %v470 = vld [vmem:[%s5 + $0x1c] sm:$0xf]
    %v471 = vld [vmem:[%s5 + $0x20] sm:$0xf]
    %v472 = vld [vmem:[%s5 + $0x24] sm:$0xf]
    %v473 = vld [vmem:[%s5 + $0x28] sm:$0xf]
    %v474 = vld [vmem:[%s5 + $0x2c] sm:$0xf]
    %v475 = vld [vmem:[%s5 + $0x30] sm:$0xf]
    %v476 = vld [vmem:[%s5 + $0x34] sm:$0xf]
    %v477 = vld [vmem:[%s5 + $0x38] sm:$0xf]
    %v478 = vld [vmem:[%s5 + $0x3c] sm:$0xf]
    %v479 = vld [vmem:[%s6] sm:$0x1]
    %v481 = vlaneseq
    %v482 = vshrl.u32 %v481, 7
    %v483 = vsub.s32 0, %v482
    %v484 = vrot.slane %v479, %v483
    %v502 = vunpack.c.l.b16 %v463
    %v503 = vunpack.c.l.b16 %v464
    %v504 = vunpack.c.l.b16 %v465
    %v505 = vunpack.c.l.b16 %v466
    %v506 = vunpack.c.l.b16 %v467
    %v507 = vunpack.c.l.b16 %v468
    %v508 = vunpack.c.l.b16 %v469
    %v509 = vunpack.c.l.b16 %v470
    %v510 = vunpack.c.l.b16 %v471
    %v511 = vunpack.c.l.b16 %v472
    %v512 = vunpack.c.l.b16 %v473
    %v513 = vunpack.c.l.b16 %v474
    %v514 = vunpack.c.l.b16 %v475
    %v515 = vunpack.c.l.b16 %v476
    %v516 = vunpack.c.l.b16 %v477
    %v517 = vunpack.c.l.b16 %v478
    %v518 = vpack.c.b16 %v503, %v502
    %v519 = vpack.c.b16 %v505, %v504
    %v520 = vpack.c.b16 %v507, %v506
    %v521 = vpack.c.b16 %v509, %v508
    %v522 = vpack.c.b16 %v511, %v510
    %v523 = vpack.c.b16 %v513, %v512
    %v524 = vpack.c.b16 %v515, %v514
    %v525 = vpack.c.b16 %v517, %v516
    %534 = vmatprep.subr.bf16.mxu0 0
    %535 = vmatpush1.bf16.msra.mxu0 %v518
    %536 = vmatprep.subr.bf16.mxu0 0
    %537 = vmatpush1.bf16.msra.mxu0 %v519
    %538 = vmatprep.subr.bf16.mxu0 0
    %539 = vmatpush1.bf16.msra.mxu0 %v520
    %540 = vmatprep.subr.bf16.mxu0 0
    %541 = vmatpush1.bf16.msra.mxu0 %v521
    %542 = vmatprep.subr.bf16.mxu0 0
    %543 = vmatpush1.bf16.msra.mxu0 %v522
    %544 = vmatprep.subr.bf16.mxu0 0
    %545 = vmatpush1.bf16.msra.mxu0 %v523
    %546 = vmatprep.subr.bf16.mxu0 0
    %547 = vmatpush1.bf16.msra.mxu0 %v524
    %548 = vmatprep.subr.bf16.mxu0 0
    %549 = vmatpush1.bf16.msra.mxu0 %v525
    %550 = vmatprep.subr.bf16.mxu0 0
    %551 = vmatpush1.bf16.msra.mxu0 0
    %552 = vmatprep.subr.bf16.mxu0 0
    %553 = vmatpush1.bf16.msra.mxu0 0
    %554 = vmatprep.subr.bf16.mxu0 0
    %555 = vmatpush1.bf16.msra.mxu0 0
    %556 = vmatprep.subr.bf16.mxu0 0
    %557 = vmatpush1.bf16.msra.mxu0 0
    %558 = vmatprep.subr.bf16.mxu0 0
    %559 = vmatpush1.bf16.msra.mxu0 0
    %560 = vmatprep.subr.bf16.mxu0 0
    %561 = vmatpush1.bf16.msra.mxu0 0
    %562 = vmatprep.subr.bf16.mxu0 0
    %563 = vmatpush1.bf16.msra.mxu0 0
    %564 = vmatprep.subr.bf16.mxu0 0
    %565 = vmatpush1.bf16.msra.mxu0 0
    %566 = vmatprep.mubr.bf16.mxu0 0
    %567 = vmatmul.mubr.bf16.gmra.mrb[0].mxu0 %v462
    %v568 = vpop.f32.mrb[0].mxu0
    %v569 = vadd.f32 %v484, %v568
    %v570 = vpop.f32.mrb[0].mxu0
    %v571 = vpop.f32.mrb[0].mxu0
    %v572 = vpop.f32.mrb[0].mxu0
    %573 = vdwg.mxu0
    %vm574 = vcmask 1041408
    %v575 = vsel %vm574, %v569, -inf
    %576 = vmax.xlane.f32.xlu0 %v575
    %v577 = vpop.xlane.xlu0 %576
    %v578 = vsub.f32 %v569, %v577
    %v579 = vmul.f32 %v578, 1.442695
    %v580 = vpow.pop %v579
    %v581 = vsel %vm574, %v580, 0.0
    %582 = vadd.xlane.f32.xlu0 %v581
    %v583 = vpop.xlane.xlu0 %582
    %v584 = vrcp.pop %v583
    %v585 = vmul.f32 %v583, %v584
    %v586 = vsub.f32 2.0, %v585
    %v587 = vmul.f32 %v584, %v586
    %v588 = vmul.f32 %v580, %v587
    %589 = vst [vmem:[#allocation2] sm:$0x3] %v588
    // Predicated region
    $region30: #{lenet_forward.5} parent=1 // pred_check
      _
    $region31: #{lenet_forward.5} parent=1 // pred_check_branch
      %591 = sbr.rel (0) target = $region33
    $region32: #{lenet_forward.5} parent=1 // pred_region
      %s593 = ssub.s32 32, 32
      %594 = vsyncadd [#allocation3], %s593
      %s596 = sshll.u32 [#allocation2], 4
      %s597 = int_to_ptr.vmem [resolvable:$true] %s596
      %599 = dma.vmem_to_hbm [thread:$0]  %s597, 32, %s7, [#allocation3]
    $region33: #{lenet_forward.5} parent=1 // pred_fallthru
      _
    // Predicated region
    $region34: #{lenet_forward.5} parent=1 // pred_check
      _
    $region35: #{lenet_forward.5} parent=1 // pred_check_branch
      %601 = sbr.rel (0) target = $region37
    $region36: #{lenet_forward.5} parent=1 // pred_region
      %602 = dma.done [#allocation3], 32
    $region37: #{lenet_forward.5} parent=1 // pred_fallthru
      _
    %603 = vsyncpa [#allocation3], 1

</llo_original>
